<compile_context>
chip_gen: v6e
topology: v6e:2x2x1
jax: 0.10.0
libtpu: 0.0.40
codegen_flags: <defaults>
</compile_context>

<pallas_src>
import functools
import math

import jax
import jax.numpy as jnp
from jax.experimental import pallas as pl
from jax.experimental.pallas import tpu as pltpu


# ---------------------------------------------------------------------------
# Shared helpers
# ---------------------------------------------------------------------------
def _layernorm(x, g, b, eps=1e-5):
    mu = jnp.mean(x, axis=-1, keepdims=True)
    var = jnp.mean((x - mu) ** 2, axis=-1, keepdims=True)
    return (x - mu) * jax.lax.rsqrt(var + eps) * g + b


def _pad_pred(pred_flat, kernel_size, outer_kernel_size):
    """Mirrors predict_next_attn's reshape + F.pad branches (pure glue)."""
    b = pred_flat.shape[0]
    if outer_kernel_size == 7:
        side = kernel_size + 2
        pred = pred_flat.reshape(b, side, side)
        if kernel_size == 1:
            return jnp.pad(pred, ((0, 0), (2, 2), (2, 2)))
        if kernel_size == 3:
            return jnp.pad(pred, ((0, 0), (1, 1), (1, 1)))
        if kernel_size == 5:
            return jnp.zeros((b, 7, 7), jnp.float32)
        return pred
    else:  # outer_kernel_size == 15
        side = kernel_size + 4
        pred = pred_flat.reshape(b, side, side)
        if kernel_size == 15:
            return jnp.zeros((b, 15, 15), jnp.float32)
        p = {3: 6, 7: 4, 11: 2}[kernel_size]
        return jnp.pad(pred, ((0, 0), (p, p), (p, p)))


def _pad8(n):
    return -(-n // 8) * 8


def _pad128(n):
    return -(-n // 128) * 128


def _pack_blocks(blocks, lanes):
    """Stack 2-D blocks row-wise; each block is zero-padded to a multiple of 8
    rows and to `lanes` lanes so every in-kernel row slice is sublane-aligned."""
    parts = []
    for blk in blocks:
        h, w = blk.shape
        parts.append(jnp.pad(blk.astype(jnp.float32),
                             ((0, _pad8(h) - h), (0, lanes - w))))
    return jnp.concatenate(parts, axis=0)


def _offsets(shapes):
    offs, r = {}, 0
    for name, (h, _w) in shapes:
        offs[name] = r
        r += _pad8(h)
    return offs


def _slab_lanes(shapes):
    return _pad128(max(w for _n, (_h, w) in shapes))


# ---------------------------------------------------------------------------
# Slab layouts (single source of truth for prepare + kernel offsets)
# ---------------------------------------------------------------------------
def _const_shapes(*, B, Nh, hw, dk, dv, C, n_pred):
    dkh, dvh = dk // Nh, dv // Nh
    R = B * Nh * hw
    return [
        ("w_kv",       (Nh * C, dkh + dvh)),   # block-expanded [Wk | Wv]
        ("wz_t",       (dv, dv)),
        ("wp1_t",      (dv, dv // 2)),
        ("wp2_t",      (dv // 2, n_pred)),
        ("wf1_t",      (dv, dv)),
        ("wf2_t",      (dv, dv)),
        ("vec",        (6, dv)),               # bf1, bf2, ln1g, ln1b, ln2g, ln2b
        ("seg_oh",     (R, B * Nh)),           # row r -> one-hot of segment b*Nh+n
        ("seg_oh_t",   (B * Nh, R)),
        ("head_mask",  (B * Nh, dv)),          # head n -> lane chunk n of dv
        ("batch_oh_t", (B, B * Nh)),           # batch b -> one-hot of its Nh segments
    ]


def _qpack_shapes(*, B, Nh, hw, dk):
    dkh = dk // Nh
    R = B * Nh * hw
    return [
        ("q2d",    (B, dk)),
        ("q_rows", (R, dkh)),
        ("rel",    (R, dkh)),
    ]


# ---------------------------------------------------------------------------
# One-time re-layouts (NOT in the per-forward path)
# ---------------------------------------------------------------------------
def prepare_constants(params, *, B, Nh, dk, dv, input_dims, hw, n_pred):
    """Pack all shape-static operands (weights, LN vectors, segment masks) into
    one lane-padded slab -> one DMA per forward instead of many tiny ones."""
    dkh, dvh = dk // Nh, dv // Nh
    C = input_dims
    R = B * Nh * hw
    # W_exp[j*C + c, d] = W[j*d_head + d, c] -> the block-diagonal memory
    # expansion times this weight gives the projection already head-split.
    wk_exp = params["wk"].reshape(Nh, dkh, C).transpose(0, 2, 1).reshape(Nh * C, dkh)
    wv_exp = params["wv"].reshape(Nh, dvh, C).transpose(0, 2, 1).reshape(Nh * C, dvh)
    vec = jnp.stack([params["bf1"], params["bf2"],
                     params["ln1g"], params["ln1b"],
                     params["ln2g"], params["ln2b"]], axis=0)
    r_idx = jnp.arange(R)
    s_idx = jnp.arange(B * Nh)
    seg_oh = (r_idx[:, None] // hw == s_idx[None, :]).astype(jnp.float32)
    head_mask = ((jnp.arange(dv)[None, :] // dvh)
                 == (s_idx[:, None] % Nh)).astype(jnp.float32)
    batch_oh_t = ((s_idx[None, :] // Nh)
                  == jnp.arange(B)[:, None]).astype(jnp.float32)
    blocks = {
        "w_kv": jnp.concatenate([wk_exp, wv_exp], axis=1),
        "wz_t": params["wz"].T, "wp1_t": params["wp1"].T, "wp2_t": params["wp2"].T,
        "wf1_t": params["wf1"].T, "wf2_t": params["wf2"].T, "vec": vec,
        "seg_oh": seg_oh, "seg_oh_t": seg_oh.T,
        "head_mask": head_mask, "batch_oh_t": batch_oh_t,
    }
    shapes = _const_shapes(B=B, Nh=Nh, hw=hw, dk=dk, dv=dv, C=C, n_pred=n_pred)
    for name, shp in shapes:
        assert tuple(blocks[name].shape) == shp, (name, blocks[name].shape, shp)
    return _pack_blocks([blocks[name] for name, _ in shapes], _slab_lanes(shapes))


def prepare_rel(rel_h, rel_w, *, Nh, dkh, hw):
    """Batch-independent relative-embedding re-layout (done once)."""
    rel_h_r = rel_h.reshape(hw, Nh, dkh // 2).transpose(1, 0, 2)   # (Nh, hw, dkh/2)
    rel_w_r = rel_w.reshape(hw, Nh, dkh // 2).transpose(1, 0, 2)
    return jnp.concatenate([rel_h_r, rel_w_r], axis=2).reshape(Nh * hw, dkh)


# ---------------------------------------------------------------------------
# The single fused kernel: K/V projection -> vectorized attention ->
# combine_heads + W_z -> predict MLP -> residual -> LN -> fc MLP -> LN
# ---------------------------------------------------------------------------
def _fused_kernel(mem_exp_ref, qpack_ref, const_ref, out_ref, *,
                  B, Nh, hw, dk, dv, C, n_pred, scale, coffs, qoffs):
    dkh, dvh = dk // Nh, dv // Nh
    R = B * Nh * hw
    f32 = jnp.float32

    def cblk(name, rows, cols):
        o = coffs[name]
        return const_ref[o:o + rows, 0:cols]

    # ---- constant slab (one DMA); all row offsets 8-aligned -------------------
    w_kv = cblk("w_kv", Nh * C, dkh + dvh)
    wz_t = cblk("wz_t", dv, dv)
    wp1_t = cblk("wp1_t", dv, dv // 2)
    wp2_t = cblk("wp2_t", dv // 2, n_pred)
    wf1_t = cblk("wf1_t", dv, dv)
    wf2_t = cblk("wf2_t", dv, dv)
    vec = cblk("vec", 8, dv)                      # padded block; rows 0..5 used
    seg_oh = cblk("seg_oh", R, B * Nh)
    seg_oh_t = cblk("seg_oh_t", B * Nh, R)
    head_mask = cblk("head_mask", B * Nh, dv)
    batch_oh_t = cblk("batch_oh_t", B, B * Nh)
    bf1, bf2 = vec[0:1, :], vec[1:2, :]
    ln1g, ln1b = vec[2:3, :], vec[3:4, :]
    ln2g, ln2b = vec[4:5, :], vec[5:6, :]

    # ---- per-call slab (one DMA) ----------------------------------------------
    q2d = qpack_ref[qoffs["q2d"]:qoffs["q2d"] + B, 0:dk]           # (B, dk)
    q_rows = qpack_ref[qoffs["q_rows"]:qoffs["q_rows"] + R, 0:dkh]  # (R, dkh)
    rel = qpack_ref[qoffs["rel"]:qoffs["rel"] + R, 0:dkh]           # (R, dkh)

    # ---- 1. K/V projection: ONE MXU dot, result already head-split -----------
    #   kv[(b*Nh+n)*hw + p, 0:dkh]  == split_heads_2d(W_k(memory))[b, n, p, :]
    #   kv[(b*Nh+n)*hw + p, dkh: ]  == split_heads_2d(W_v(memory))[b, n, p, :]
    kv = jnp.dot(mem_exp_ref[...], w_kv, preferred_element_type=f32)  # (R, dkh+dvh)
    k_hs = kv[:, 0:dkh]
    v_hs = kv[:, dkh:dkh + dvh]

    # ---- 2. logits for all (batch, head, pos) rows in one slab ----------------
    # torch scales q in place through a reshape view; the scaled value is what
    # feeds both the logits and (below) the residual.
    q_rows_s = q_rows * scale                                        # (R, dkh)
    s = jnp.sum((k_hs + rel) * q_rows_s, axis=1, keepdims=True)      # (R, 1)

    # ---- 3. segmented softmax over the hw rows of each (batch, head) segment --
    s_masked = jnp.where(seg_oh > 0.5, s, f32(-1e30))                # (R, B*Nh)
    seg_max = jnp.max(s_masked, axis=0, keepdims=True)               # (1, B*Nh)
    m_rows = jnp.sum(seg_oh * seg_max, axis=1, keepdims=True)        # (R, 1)
    e = jnp.exp(s - m_rows)                                          # (R, 1)
    ev = jnp.concatenate([e * v_hs, e], axis=1)                      # (R, dvh+1)
    seg = jnp.dot(seg_oh_t, ev, preferred_element_type=f32)          # (B*Nh, dvh+1)
    # deferred normalization: the divide rides the EUP slot
    attn_h = seg[:, 0:dvh] * pl.reciprocal(seg[:, dvh:dvh + 1], approx=True)

    # ---- 4. combine_heads_2d + W_z as dots (no per-head dots / placements) ----
    attn_exp = jnp.concatenate([attn_h] * Nh, axis=1) * head_mask    # (B*Nh, dv)
    attn_c = jnp.dot(batch_oh_t, attn_exp, preferred_element_type=f32)  # (B, dv)
    z = jnp.dot(attn_c, wz_t, preferred_element_type=f32)            # (B, dv)

    # ---- 5. predict-next-attn MLP ---------------------------------------------
    h1 = jnp.maximum(jnp.dot(z, wp1_t, preferred_element_type=f32), 0.0)
    pred = jnp.dot(h1, wp2_t, preferred_element_type=f32)            # (B, n_pred)

    # ---- 6. residual (aliases scaled q), LayerNorms, fc MLP --------------------
    out1 = _layernorm(z + q2d * scale, ln1g, ln1b)
    h2 = jnp.maximum(jnp.dot(out1, wf1_t, preferred_element_type=f32) + bf1, 0.0)
    o2 = jnp.dot(h2, wf2_t, preferred_element_type=f32) + bf2
    out2 = _layernorm(o2 + out1, ln2g, ln2b)

    # ---- packed output [out2 | pred]: one store, one output DMA ----------------
    out_ref[...] = jnp.concatenate([out2, pred], axis=1)


# ---------------------------------------------------------------------------
# Forward wrapper: one pallas_call + tiny layout plumbing / pad glue
# ---------------------------------------------------------------------------
def attn2d_forward(const_slab, q, memory, rel_r, *, kernel_size,
                   outer_kernel_size, Nh, dk, dv, prev_attn=None):
    assert prev_attn is None, "prev_attn logits-bias branch not implemented"
    B, hw, C = memory.shape
    assert q.shape == (B, 1, dk)
    assert dk == dv, "residual add requires dk == dv (as in the torch module)"
    dkh = dk // Nh
    n_pred = ((kernel_size + 2) ** 2 if outer_kernel_size == 7
              else (kernel_size + 4) ** 2)
    R = B * Nh * hw
    scale = dkh ** (-0.5)

    # ---- layout plumbing only (no compute hoisted out of the kernel) ----------
    # Block-diagonal expansion of `memory` so the in-kernel projection lands
    # directly in torch's reshape(b, Nh, hw, d//Nh) head split.
    # TODO(synk): for large hw (outer_kernel_size=15) build this expansion
    #             in-kernel to avoid the Nh x HBM round-trip; negligible at hw=9.
    eye = jnp.eye(Nh, dtype=memory.dtype)
    mem_exp = (memory[:, :, None, None, :] * eye[None, None, :, :, None]
               ).reshape(R, Nh * C)
    q2d = q.reshape(B, dk)
    q_rows = jnp.repeat(q2d.reshape(B * Nh, dkh), hw, axis=0)        # unscaled
    rel_tiled = jnp.tile(rel_r, (B, 1))                              # (R, dkh)
    qpack = _pack_blocks([q2d, q_rows, rel_tiled], dk)
    qoffs = _offsets(_qpack_shapes(B=B, Nh=Nh, hw=hw, dk=dk))
    coffs = _offsets(_const_shapes(B=B, Nh=Nh, hw=hw, dk=dk, dv=dv,
                                   C=C, n_pred=n_pred))

    kern = functools.partial(_fused_kernel, B=B, Nh=Nh, hw=hw, dk=dk, dv=dv,
                             C=C, n_pred=n_pred, scale=scale,
                             coffs=coffs, qoffs=qoffs)
    # Footprint is < 1 MiB, comfortably inside the scoped-VMEM default on
    # v5e / v6e / v7x.  For large batches, grid over B with
    # dimension_semantics=("parallel",) so both v7x TensorCores are used and
    # re-derive tiling against v7x's 64 MiB VMEM.
    packed = pl.pallas_call(
        kern,
        out_shape=jax.ShapeDtypeStruct((B, dv + n_pred), jnp.float32),
        grid=(1,),
        in_specs=[
            pl.BlockSpec(mem_exp.shape, lambda i: (0, 0)),
            pl.BlockSpec(qpack.shape, lambda i: (0, 0)),
            pl.BlockSpec(const_slab.shape, lambda i: (0, 0)),
        ],
        out_specs=pl.BlockSpec((B, dv + n_pred), lambda i: (0, 0)),
        compiler_params=pltpu.CompilerParams(dimension_semantics=("arbitrary",)),
    )(mem_exp, qpack, const_slab)

    out2 = packed[:, 0:dv].reshape(B, 1, dv)
    attn_pred = _pad_pred(packed[:, dv:dv + n_pred], kernel_size, outer_kernel_size)
    return out2, attn_pred


# ---------------------------------------------------------------------------
# Pure-JAX transcription of the torch forward (for numerical verification)
# ---------------------------------------------------------------------------
def reference_forward(params, q, memory, rel_h, rel_w, *, kernel_size,
                      outer_kernel_size, Nh, dk, dv):
    hp = jax.lax.Precision.HIGHEST
    B, hw, C = memory.shape
    dkh, dvh = dk // Nh, dv // Nh
    k = jnp.einsum('bpc,kc->bpk', memory, params["wk"], precision=hp)
    v = jnp.einsum('bpc,kc->bpk', memory, params["wv"], precision=hp)
    qh = q.reshape(B, Nh, 1, dkh) * dkh ** (-0.5)
    kh = k.reshape(B, Nh, hw, dkh)
    vh = v.reshape(B, Nh, hw, dvh)
    logits = jnp.einsum('bnqd,bnkd->bnqk', qh, kh, precision=hp)
    rel_h_r = rel_h.reshape(hw, Nh, dkh // 2).transpose(1, 0, 2)
    rel_w_r = rel_w.reshape(hw, Nh, dkh // 2).transpose(1, 0, 2)
    rel = jnp.concatenate([rel_h_r, rel_w_r], axis=2)                 # (Nh, hw, dkh)
    logits = logits + jnp.einsum('bnqd,nkd->bnqk', qh, rel, precision=hp)
    weights = jax.nn.softmax(logits, axis=3)
    attn = jnp.einsum('bnqk,bnkd->bnqd', weights, vh, precision=hp)
    attn = attn.reshape(B, 1, Nh * dvh)
    attn = jnp.einsum('bqd,ed->bqe', attn, params["wz"], precision=hp)
    h1 = jnp.maximum(jnp.einsum('bqd,ed->bqe', attn, params["wp1"], precision=hp), 0.0)
    pred = jnp.einsum('bqd,ed->bqe', h1, params["wp2"], precision=hp)
    residual = q * dkh ** (-0.5)          # torch's in-place scale aliases residual
    out1 = _layernorm(attn + residual, params["ln1g"], params["ln1b"])
    h2 = jnp.maximum(jnp.einsum('bqd,ed->bqe', out1, params["wf1"], precision=hp)
                     + params["bf1"], 0.0)
    o2 = jnp.einsum('bqd,ed->bqe', h2, params["wf2"], precision=hp) + params["bf2"]
    out2 = _layernorm(o2 + out1, params["ln2g"], params["ln2b"])
    attn_pred = _pad_pred(pred.reshape(B, -1), kernel_size, outer_kernel_size)
    return out2, attn_pred


# ---------------------------------------------------------------------------
if __name__ == "__main__":
    # Module config (outer_kernel_size == 7 branch, kernel_size == 3)
    B = 2
    input_dims = 32
    kernel_size = 3
    outer_kernel_size = 7
    Nh = 4
    dk = 32
    dv = 32
    hw = kernel_size ** 2
    dkh = dk // Nh
    n_pred = (kernel_size + 2) ** 2          # 25

    key = jax.random.PRNGKey(0)
    ks = jax.random.split(key, 16)

    def kaiming(k, shape, fan_in):           # kaiming_normal_(a=1) => std = 1/sqrt(fan_in)
        return jax.random.normal(k, shape, jnp.float32) / math.sqrt(fan_in)

    params = dict(
        wk=kaiming(ks[0], (dk, input_dims), input_dims),
        wv=kaiming(ks[1], (dv, input_dims), input_dims),
        wz=kaiming(ks[2], (dv, dv), dv),
        # fc = fully_connected(dv, dv, dv, bias=True)  (Linear-ReLU-Linear)
        wf1=kaiming(ks[3], (dv, dv), dv),
        bf1=0.01 * jax.random.normal(ks[4], (dv,), jnp.float32),
        wf2=kaiming(ks[5], (dv, dv), dv),
        bf2=0.01 * jax.random.normal(ks[6], (dv,), jnp.float32),
        # predict_next_fc = fully_connected(dv, dv//2, (ks+2)**2, bias=False)
        wp1=kaiming(ks[7], (dv // 2, dv), dv),
        wp2=kaiming(ks[8], (n_pred, dv // 2), dv // 2),
        # LayerNorm defaults
        ln1g=jnp.ones((dv,), jnp.float32), ln1b=jnp.zeros((dv,), jnp.float32),
        ln2g=jnp.ones((dv,), jnp.float32), ln2b=jnp.zeros((dv,), jnp.float32),
    )

    q = jax.random.normal(ks[10], (B, 1, dk), jnp.float32)
    memory = jax.random.normal(ks[11], (B, hw, input_dims), jnp.float32)
    rel_h = jax.random.normal(ks[12], (hw, Nh, dkh // 2), jnp.float32)
    rel_w = jax.random.normal(ks[13], (hw, Nh, dkh // 2), jnp.float32)

    # One-time re-layouts / packing (outside the per-forward path).
    const_slab = prepare_constants(params, B=B, Nh=Nh, dk=dk, dv=dv,
                                   input_dims=input_dims, hw=hw, n_pred=n_pred)
    rel_r = prepare_rel(rel_h, rel_w, Nh=Nh, dkh=dkh, hw=hw)

    fwd = jax.jit(functools.partial(
        attn2d_forward, kernel_size=kernel_size,
        outer_kernel_size=outer_kernel_size, Nh=Nh, dk=dk, dv=dv))
    out2, attn_pred = fwd(const_slab, q, memory, rel_r)
    out2 = jax.block_until_ready(out2)
    attn_pred = jax.block_until_ready(attn_pred)

    assert out2.shape == (B, 1, dv)
    assert attn_pred.shape == (B, outer_kernel_size, outer_kernel_size)
    assert bool(jnp.all(jnp.isfinite(out2))) and bool(jnp.all(jnp.isfinite(attn_pred)))

    # Numerical check against a pure-JAX transcription of the torch forward.
    ref_out2, ref_pred = reference_forward(
        params, q, memory, rel_h, rel_w, kernel_size=kernel_size,
        outer_kernel_size=outer_kernel_size, Nh=Nh, dk=dk, dv=dv)
    assert bool(jnp.allclose(out2, ref_out2, atol=2e-2, rtol=2e-2)), \
        float(jnp.max(jnp.abs(out2 - ref_out2)))
    assert bool(jnp.allclose(attn_pred, ref_pred, atol=2e-2, rtol=2e-2)), \
        float(jnp.max(jnp.abs(attn_pred - ref_pred)))

    print("KERNEL_OK")
</pallas_src>

<mosaic_0001>
module attributes {stable_mosaic.version = 11 : i64} {
  func.func @_fused_kernel(%arg0: i32, %arg1: memref<72x128xf32, #tpu.memory_space<vmem>>, %arg2: memref<152x32xf32, #tpu.memory_space<vmem>>, %arg3: memref<376x128xf32, #tpu.memory_space<vmem>>, %arg4: memref<2x57xf32, #tpu.memory_space<vmem>>) attributes {dimension_semantics = [#tpu.dimension_semantics<arbitrary>], iteration_bounds = array<i64: 1>, scalar_prefetch = 0 : i64, scratch_operands = 0 : i64, tpu.core_type = #tpu.core_type<tc>, window_params = [{pipeline_mode = #tpu.pipeline_mode<synchronous>, transform_indices = @transform_0, window_bounds = array<i64: 72, 128>}, {pipeline_mode = #tpu.pipeline_mode<synchronous>, transform_indices = @transform_1, window_bounds = array<i64: 152, 32>}, {pipeline_mode = #tpu.pipeline_mode<synchronous>, transform_indices = @transform_2, window_bounds = array<i64: 376, 128>}, {pipeline_mode = #tpu.pipeline_mode<synchronous>, transform_indices = @transform_3, window_bounds = array<i64: 2, 57>}]} {
    %c0 = arith.constant 0 : index
    %c0_0 = arith.constant 0 : index
    %0 = vector.load %arg3[%c0, %c0_0] : memref<376x128xf32, #tpu.memory_space<vmem>>, vector<128x16xf32>
    %c128 = arith.constant 128 : index
    %c0_1 = arith.constant 0 : index
    %1 = vector.load %arg3[%c128, %c0_1] : memref<376x128xf32, #tpu.memory_space<vmem>>, vector<32x32xf32>
    %c160 = arith.constant 160 : index
    %c0_2 = arith.constant 0 : index
    %2 = vector.load %arg3[%c160, %c0_2] : memref<376x128xf32, #tpu.memory_space<vmem>>, vector<32x16xf32>
    %c192 = arith.constant 192 : index
    %c0_3 = arith.constant 0 : index
    %3 = vector.load %arg3[%c192, %c0_3] : memref<376x128xf32, #tpu.memory_space<vmem>>, vector<16x25xf32>
    %c208 = arith.constant 208 : index
    %c0_4 = arith.constant 0 : index
    %4 = vector.load %arg3[%c208, %c0_4] : memref<376x128xf32, #tpu.memory_space<vmem>>, vector<32x32xf32>
    %c240 = arith.constant 240 : index
    %c0_5 = arith.constant 0 : index
    %5 = vector.load %arg3[%c240, %c0_5] : memref<376x128xf32, #tpu.memory_space<vmem>>, vector<32x32xf32>
    %c272 = arith.constant 272 : index
    %c0_6 = arith.constant 0 : index
    %6 = vector.load %arg3[%c272, %c0_6] : memref<376x128xf32, #tpu.memory_space<vmem>>, vector<8x32xf32>
    %c280 = arith.constant 280 : index
    %c0_7 = arith.constant 0 : index
    %7 = vector.load %arg3[%c280, %c0_7] : memref<376x128xf32, #tpu.memory_space<vmem>>, vector<72x8xf32>
    %c352 = arith.constant 352 : index
    %c0_8 = arith.constant 0 : index
    %8 = vector.load %arg3[%c352, %c0_8] : memref<376x128xf32, #tpu.memory_space<vmem>>, vector<8x72xf32>
    %c360 = arith.constant 360 : index
    %c0_9 = arith.constant 0 : index
    %9 = vector.load %arg3[%c360, %c0_9] : memref<376x128xf32, #tpu.memory_space<vmem>>, vector<8x32xf32>
    %c368 = arith.constant 368 : index
    %c0_10 = arith.constant 0 : index
    %10 = vector.load %arg3[%c368, %c0_10] : memref<376x128xf32, #tpu.memory_space<vmem>>, vector<2x8xf32>
    %11 = vector.extract_strided_slice %6 {offsets = [0, 0], sizes = [1, 32], strides = [1, 1]} : vector<8x32xf32> to vector<1x32xf32>
    %12 = vector.extract_strided_slice %6 {offsets = [1, 0], sizes = [1, 32], strides = [1, 1]} : vector<8x32xf32> to vector<1x32xf32>
    %13 = vector.extract_strided_slice %6 {offsets = [2, 0], sizes = [1, 32], strides = [1, 1]} : vector<8x32xf32> to vector<1x32xf32>
    %14 = vector.extract_strided_slice %6 {offsets = [3, 0], sizes = [1, 32], strides = [1, 1]} : vector<8x32xf32> to vector<1x32xf32>
    %15 = vector.extract_strided_slice %6 {offsets = [4, 0], sizes = [1, 32], strides = [1, 1]} : vector<8x32xf32> to vector<1x32xf32>
    %16 = vector.extract_strided_slice %6 {offsets = [5, 0], sizes = [1, 32], strides = [1, 1]} : vector<8x32xf32> to vector<1x32xf32>
    %c0_11 = arith.constant 0 : index
    %c0_12 = arith.constant 0 : index
    %17 = vector.load %arg2[%c0_11, %c0_12] : memref<152x32xf32, #tpu.memory_space<vmem>>, vector<2x32xf32>
    %c8 = arith.constant 8 : index
    %c0_13 = arith.constant 0 : index
    %18 = vector.load %arg2[%c8, %c0_13] : memref<152x32xf32, #tpu.memory_space<vmem>>, vector<72x8xf32>
    %c80 = arith.constant 80 : index
    %c0_14 = arith.constant 0 : index
    %19 = vector.load %arg2[%c80, %c0_14] : memref<152x32xf32, #tpu.memory_space<vmem>>, vector<72x8xf32>
    %c0_15 = arith.constant 0 : index
    %c0_16 = arith.constant 0 : index
    %20 = vector.load %arg1[%c0_15, %c0_16] : memref<72x128xf32, #tpu.memory_space<vmem>>, vector<72x128xf32>
    %cst = arith.constant dense<0.000000e+00> : vector<72x16xf32>
    %21 = tpu.matmul %20, %0, %cst {dimension_numbers = #tpu.dot_dimension_numbers<[1], [0], [0], [1], [0, 0, 1, 1], [], []>} : vector<72x128xf32>, vector<128x16xf32>, vector<72x16xf32> -> vector<72x16xf32>
    %22 = vector.extract_strided_slice %21 {offsets = [0, 0], sizes = [72, 8], strides = [1, 1]} : vector<72x16xf32> to vector<72x8xf32>
    %23 = vector.extract_strided_slice %21 {offsets = [0, 8], sizes = [72, 8], strides = [1, 1]} : vector<72x16xf32> to vector<72x8xf32>
    %cst_17 = arith.constant 0.353553385 : f32
    %24 = vector.broadcast %cst_17 : f32 to vector<72x8xf32>
    %25 = arith.mulf %18, %24 : vector<72x8xf32>
    %26 = arith.addf %22, %19 : vector<72x8xf32>
    %27 = arith.mulf %26, %25 : vector<72x8xf32>
    %cst_18 = arith.constant dense<0.000000e+00> : vector<72xf32>
    %28 = vector.multi_reduction <add>, %27, %cst_18 [1] : vector<72x8xf32> to vector<72xf32>
    %29 = vector.shape_cast %28 : vector<72xf32> to vector<72x1xf32>
    %cst_19 = arith.constant 5.000000e-01 : f32
    %30 = vector.broadcast %cst_19 : f32 to vector<72x8xf32>
    %31 = arith.cmpf ogt, %7, %30 : vector<72x8xf32>
    %cst_20 = arith.constant -1.000000e+30 : f32
    %32 = vector.shape_cast %29 : vector<72x1xf32> to vector<72x1xf32>
    %33 = vector.broadcast %32 : vector<72x1xf32> to vector<72x8xf32>
    %34 = vector.broadcast %cst_20 : f32 to vector<72x8xf32>
    %35 = arith.select %31, %33, %34 : vector<72x8xi1>, vector<72x8xf32>
    %cst_21 = arith.constant dense<0xFF800000> : vector<8xf32>
    %36 = vector.multi_reduction <maximumf>, %35, %cst_21 [0] : vector<72x8xf32> to vector<8xf32>
    %37 = vector.shape_cast %36 : vector<8xf32> to vector<1x8xf32>
    %38 = vector.broadcast %37 : vector<1x8xf32> to vector<72x8xf32>
    %39 = arith.mulf %7, %38 : vector<72x8xf32>
    %cst_22 = arith.constant dense<0.000000e+00> : vector<72xf32>
    %40 = vector.multi_reduction <add>, %39, %cst_22 [1] : vector<72x8xf32> to vector<72xf32>
    %41 = vector.shape_cast %40 : vector<72xf32> to vector<72x1xf32>
    %42 = arith.subf %29, %41 : vector<72x1xf32>
    %43 = math.exp %42 : vector<72x1xf32>
    %44 = vector.broadcast %43 : vector<72x1xf32> to vector<72x8xf32>
    %45 = arith.mulf %44, %23 : vector<72x8xf32>
    %46 = tpu.concatenate %45, %43 in 1 : vector<72x8xf32>, vector<72x1xf32> -> vector<72x9xf32>
    %cst_23 = arith.constant dense<0.000000e+00> : vector<8x9xf32>
    %47 = tpu.matmul %8, %46, %cst_23 {dimension_numbers = #tpu.dot_dimension_numbers<[1], [0], [0], [1], [0, 0, 1, 1], [], []>} : vector<8x72xf32>, vector<72x9xf32>, vector<8x9xf32> -> vector<8x9xf32>
    %48 = vector.extract_strided_slice %47 {offsets = [0, 0], sizes = [8, 8], strides = [1, 1]} : vector<8x9xf32> to vector<8x8xf32>
    %49 = vector.extract_strided_slice %47 {offsets = [0, 8], sizes = [8, 1], strides = [1, 1]} : vector<8x9xf32> to vector<8x1xf32>
    %50 = tpu.reciprocal %49 {approx = true} : vector<8x1xf32> -> vector<8x1xf32>
    %51 = vector.broadcast %50 : vector<8x1xf32> to vector<8x8xf32>
    %52 = arith.mulf %48, %51 : vector<8x8xf32>
    %53 = tpu.concatenate %52, %52, %52, %52 in 1 : vector<8x8xf32>, vector<8x8xf32>, vector<8x8xf32>, vector<8x8xf32> -> vector<8x32xf32>
    %54 = arith.mulf %53, %9 : vector<8x32xf32>
    %cst_24 = arith.constant dense<0.000000e+00> : vector<2x32xf32>
    %55 = tpu.matmul %10, %54, %cst_24 {dimension_numbers = #tpu.dot_dimension_numbers<[1], [0], [0], [1], [0, 0, 1, 1], [], []>} : vector<2x8xf32>, vector<8x32xf32>, vector<2x32xf32> -> vector<2x32xf32>
    %cst_25 = arith.constant dense<0.000000e+00> : vector<2x32xf32>
    %56 = tpu.matmul %55, %1, %cst_25 {dimension_numbers = #tpu.dot_dimension_numbers<[1], [0], [0], [1], [0, 0, 1, 1], [], []>} : vector<2x32xf32>, vector<32x32xf32>, vector<2x32xf32> -> vector<2x32xf32>
    %cst_26 = arith.constant dense<0.000000e+00> : vector<2x16xf32>
    %57 = tpu.matmul %56, %2, %cst_26 {dimension_numbers = #tpu.dot_dimension_numbers<[1], [0], [0], [1], [0, 0, 1, 1], [], []>} : vector<2x32xf32>, vector<32x16xf32>, vector<2x16xf32> -> vector<2x16xf32>
    %cst_27 = arith.constant 0.000000e+00 : f32
    %58 = vector.broadcast %cst_27 : f32 to vector<2x16xf32>
    %59 = arith.maximumf %57, %58 : vector<2x16xf32>
    %cst_28 = arith.constant dense<0.000000e+00> : vector<2x25xf32>
    %60 = tpu.matmul %59, %3, %cst_28 {dimension_numbers = #tpu.dot_dimension_numbers<[1], [0], [0], [1], [0, 0, 1, 1], [], []>} : vector<2x16xf32>, vector<16x25xf32>, vector<2x25xf32> -> vector<2x25xf32>
    %cst_29 = arith.constant 0.353553385 : f32
    %61 = vector.broadcast %cst_29 : f32 to vector<2x32xf32>
    %62 = arith.mulf %17, %61 : vector<2x32xf32>
    %63 = arith.addf %56, %62 : vector<2x32xf32>
    %cst_30 = arith.constant dense<0.000000e+00> : vector<2xf32>
    %64 = vector.multi_reduction <add>, %63, %cst_30 [1] : vector<2x32xf32> to vector<2xf32>
    %65 = vector.shape_cast %64 : vector<2xf32> to vector<2x1xf32>
    %cst_31 = arith.constant 3.200000e+01 : f32
    %66 = vector.broadcast %cst_31 : f32 to vector<2x1xf32>
    %67 = arith.divf %65, %66 : vector<2x1xf32>
    %68 = vector.broadcast %67 : vector<2x1xf32> to vector<2x32xf32>
    %69 = arith.subf %63, %68 : vector<2x32xf32>
    %70 = arith.mulf %69, %69 : vector<2x32xf32>
    %cst_32 = arith.constant dense<0.000000e+00> : vector<2xf32>
    %71 = vector.multi_reduction <add>, %70, %cst_32 [1] : vector<2x32xf32> to vector<2xf32>
    %72 = vector.shape_cast %71 : vector<2xf32> to vector<2x1xf32>
    %cst_33 = arith.constant 3.200000e+01 : f32
    %73 = vector.broadcast %cst_33 : f32 to vector<2x1xf32>
    %74 = arith.divf %72, %73 : vector<2x1xf32>
    %75 = vector.broadcast %67 : vector<2x1xf32> to vector<2x32xf32>
    %76 = arith.subf %63, %75 : vector<2x32xf32>
    %cst_34 = arith.constant 9.99999974E-6 : f32
    %77 = vector.broadcast %cst_34 : f32 to vector<2x1xf32>
    %78 = arith.addf %74, %77 : vector<2x1xf32>
    %79 = math.rsqrt %78 : vector<2x1xf32>
    %80 = vector.broadcast %79 : vector<2x1xf32> to vector<2x32xf32>
    %81 = arith.mulf %76, %80 : vector<2x32xf32>
    %82 = vector.broadcast %13 : vector<1x32xf32> to vector<2x32xf32>
    %83 = arith.mulf %81, %82 : vector<2x32xf32>
    %84 = vector.broadcast %14 : vector<1x32xf32> to vector<2x32xf32>
    %85 = arith.addf %83, %84 : vector<2x32xf32>
    %cst_35 = arith.constant dense<0.000000e+00> : vector<2x32xf32>
    %86 = tpu.matmul %85, %4, %cst_35 {dimension_numbers = #tpu.dot_dimension_numbers<[1], [0], [0], [1], [0, 0, 1, 1], [], []>} : vector<2x32xf32>, vector<32x32xf32>, vector<2x32xf32> -> vector<2x32xf32>
    %87 = vector.broadcast %11 : vector<1x32xf32> to vector<2x32xf32>
    %88 = arith.addf %86, %87 : vector<2x32xf32>
    %cst_36 = arith.constant 0.000000e+00 : f32
    %89 = vector.broadcast %cst_36 : f32 to vector<2x32xf32>
    %90 = arith.maximumf %88, %89 : vector<2x32xf32>
    %cst_37 = arith.constant dense<0.000000e+00> : vector<2x32xf32>
    %91 = tpu.matmul %90, %5, %cst_37 {dimension_numbers = #tpu.dot_dimension_numbers<[1], [0], [0], [1], [0, 0, 1, 1], [], []>} : vector<2x32xf32>, vector<32x32xf32>, vector<2x32xf32> -> vector<2x32xf32>
    %92 = vector.broadcast %12 : vector<1x32xf32> to vector<2x32xf32>
    %93 = arith.addf %91, %92 : vector<2x32xf32>
    %94 = arith.addf %93, %85 : vector<2x32xf32>
    %cst_38 = arith.constant dense<0.000000e+00> : vector<2xf32>
    %95 = vector.multi_reduction <add>, %94, %cst_38 [1] : vector<2x32xf32> to vector<2xf32>
    %96 = vector.shape_cast %95 : vector<2xf32> to vector<2x1xf32>
    %cst_39 = arith.constant 3.200000e+01 : f32
    %97 = vector.broadcast %cst_39 : f32 to vector<2x1xf32>
    %98 = arith.divf %96, %97 : vector<2x1xf32>
    %99 = vector.broadcast %98 : vector<2x1xf32> to vector<2x32xf32>
    %100 = arith.subf %94, %99 : vector<2x32xf32>
    %101 = arith.mulf %100, %100 : vector<2x32xf32>
    %cst_40 = arith.constant dense<0.000000e+00> : vector<2xf32>
    %102 = vector.multi_reduction <add>, %101, %cst_40 [1] : vector<2x32xf32> to vector<2xf32>
    %103 = vector.shape_cast %102 : vector<2xf32> to vector<2x1xf32>
    %cst_41 = arith.constant 3.200000e+01 : f32
    %104 = vector.broadcast %cst_41 : f32 to vector<2x1xf32>
    %105 = arith.divf %103, %104 : vector<2x1xf32>
    %106 = vector.broadcast %98 : vector<2x1xf32> to vector<2x32xf32>
    %107 = arith.subf %94, %106 : vector<2x32xf32>
    %cst_42 = arith.constant 9.99999974E-6 : f32
    %108 = vector.broadcast %cst_42 : f32 to vector<2x1xf32>
    %109 = arith.addf %105, %108 : vector<2x1xf32>
    %110 = math.rsqrt %109 : vector<2x1xf32>
    %111 = vector.broadcast %110 : vector<2x1xf32> to vector<2x32xf32>
    %112 = arith.mulf %107, %111 : vector<2x32xf32>
    %113 = vector.broadcast %15 : vector<1x32xf32> to vector<2x32xf32>
    %114 = arith.mulf %112, %113 : vector<2x32xf32>
    %115 = vector.broadcast %16 : vector<1x32xf32> to vector<2x32xf32>
    %116 = arith.addf %114, %115 : vector<2x32xf32>
    %117 = tpu.concatenate %116, %60 in 1 : vector<2x32xf32>, vector<2x25xf32> -> vector<2x57xf32>
    %c0_43 = arith.constant 0 : index
    %c0_44 = arith.constant 0 : index
    %118 = vector.load %arg4[%c0_43, %c0_44] : memref<2x57xf32, #tpu.memory_space<vmem>>, vector<2x57xf32>
    tpu.vector_store %arg4[%c0_43, %c0_44], %117 {strides = array<i32>} : memref<2x57xf32, #tpu.memory_space<vmem>>, vector<2x57xf32>,
    return
  }
  func.func @transform_0(%arg0: i32) -> (i32, i32) {
    %c0_i32 = arith.constant 0 : i32
    %c0_i32_0 = arith.constant 0 : i32
    %c0_i32_1 = arith.constant 0 : i32
    return %c0_i32, %c0_i32_0 : i32, i32
  }
  func.func @transform_1(%arg0: i32) -> (i32, i32) {
    %c0_i32 = arith.constant 0 : i32
    %c0_i32_0 = arith.constant 0 : i32
    %c0_i32_1 = arith.constant 0 : i32
    return %c0_i32, %c0_i32_0 : i32, i32
  }
  func.func @transform_2(%arg0: i32) -> (i32, i32) {
    %c0_i32 = arith.constant 0 : i32
    %c0_i32_0 = arith.constant 0 : i32
    %c0_i32_1 = arith.constant 0 : i32
    return %c0_i32, %c0_i32_0 : i32, i32
  }
  func.func @transform_3(%arg0: i32) -> (i32, i32) {
    %c0_i32 = arith.constant 0 : i32
    %c0_i32_0 = arith.constant 0 : i32
    %c0_i32_1 = arith.constant 0 : i32
    return %c0_i32, %c0_i32_0 : i32, i32
  }
}

</mosaic_0001>

<llo_original>
// kernel: tile.9
$region0: #{tile.9}
  %s0 = inlined_call_operand.vmem [shape: f32[2,36,8], index: 0, kind: input, shape index: {}]
  %s1 = inlined_call_operand.vmem [shape: f32[72,8], index: 1, kind: output, shape index: {}]
  $region1: #{tile.9} parent=0
    #allocation0 [shape = 'u8[32768]{0}', space=vmem, size = 0x8000, scoped, tag = 'scoped mem for input reshape']
    %s3 = sshll.u32 1, 2
    %s4 = ssub.s32 %s3, 1
    %s5 = smul.addr 2, 7
    %s6 = scalar_lea.vmem %s0, %s5
    %v7 = vld [vmem:[%s6] sm:%s4]
    %s8 = scalar_lea.vmem [#allocation0], 56
    %9 = vst [vmem:[%s8] sm:%s4] %v7
    %s10 = smul.addr 2, 6
    %s11 = scalar_lea.vmem %s0, %s10
    %v12 = vld [vmem:[%s11] sm:%s4]
    %s13 = scalar_lea.vmem [#allocation0], 48
    %14 = vst [vmem:[%s13] sm:%s4] %v12
    %s15 = smul.addr 2, 5
    %s16 = scalar_lea.vmem %s0, %s15
    %v17 = vld [vmem:[%s16] sm:%s4]
    %s18 = scalar_lea.vmem [#allocation0], 40
    %19 = vst [vmem:[%s18] sm:%s4] %v17
    %s20 = smul.addr 2, 4
    %s21 = scalar_lea.vmem %s0, %s20
    %v22 = vld [vmem:[%s21] sm:%s4]
    %s23 = scalar_lea.vmem [#allocation0], 32
    %24 = vst [vmem:[%s23] sm:%s4] %v22
    %s25 = smul.addr 2, 3
    %s26 = scalar_lea.vmem %s0, %s25
    %v27 = vld [vmem:[%s26] sm:%s4]
    %s28 = scalar_lea.vmem [#allocation0], 24
    %29 = vst [vmem:[%s28] sm:%s4] %v27
    %s30 = smul.addr 2, 2
    %s31 = scalar_lea.vmem %s0, %s30
    %v32 = vld [vmem:[%s31] sm:%s4]
    %s33 = scalar_lea.vmem [#allocation0], 16
    %34 = vst [vmem:[%s33] sm:%s4] %v32
    %s35 = scalar_lea.vmem %s0, 2
    %v36 = vld [vmem:[%s35] sm:%s4]
    %s37 = scalar_lea.vmem [#allocation0], 8
    %38 = vst [vmem:[%s37] sm:%s4] %v36
    %v39 = vld [vmem:[%s0] sm:%s4]
    %40 = vst [vmem:[#allocation0] sm:%s4] %v39
    %v41 = vld [vmem:[#allocation0] ss:$8 sm:$0xf]
    %v42 = vld [vmem:[#allocation0] ss:$8 sm:$0xf0]
    %vm43 = vcmask 1047556
    %v44 = vsel %vm43, %v42, %v41
    %vm45 = vcmask 293888
    %46 = vst.msk [vmem:[%s1] sm:$0xff] %vm45, %v44
    %s47 = scalar_lea.vmem [#allocation0], 1
    %v48 = vld [vmem:[%s47] ss:$8 sm:$0xf]
    %s49 = scalar_lea.vmem [#allocation0], 1
    %v50 = vld [vmem:[%s49] ss:$8 sm:$0xf0]
    %vm51 = vcmask 1047556
    %v52 = vsel %vm51, %v50, %v48
    %53 = vrot.lane.b32.xlu0 %v52, 36
    %v54 = vpop.permute.xlu0 %53
    %vm55 = vcmask 589088
    %56 = vst.msk [vmem:[%s1] sm:$0xff] %vm55, %v54

// kernel: attn2d_forward.1
$region0: #{attn2d_forward.1}
  #allocation0 [shape = 'u32[]', space=smem, size = 0x4, offset = 0x4, fixed_abs, tag = 'smem constant byte address 0x4 - core index']
  #allocation1 [shape = 'u32[144,128]{1,0:T(1,128)}', space=vmem, size = 0x12000, scoped, tag = 'internal scratch']
  %s0 = inlined_call_operand.vmem [shape: f32[72,128], index: 0, kind: input, shape index: {}]
  %s1 = inlined_call_operand.vmem [shape: f32[152,32], index: 1, kind: input, shape index: {}]
  %s2 = inlined_call_operand.vmem [shape: f32[376,128], index: 2, kind: input, shape index: {}]
  %s3 = inlined_call_operand.vmem [shape: f32[2,57], index: 3, kind: output, shape index: {}]
  %s4 = sld [smem:[#allocation0]]
  $region22: #{attn2d_forward.1} parent=0
    _
  %s6 = ssub.s32 1, %s4
  %s7 = scalar_select 0, %s6, %s4
  // Predicated region
  $region2: #{attn2d_forward.1} parent=0 // pred_check
    _
  $region3: #{attn2d_forward.1} parent=0 // pred_check_branch
    %9 = sbr.rel (0) target = $region5
  $region4: #{attn2d_forward.1} parent=0 // pred_region
    _
  $region5: #{attn2d_forward.1} parent=0 // pred_fallthru
    _
  // Predicated region
  $region6: #{attn2d_forward.1} parent=0 // pred_check
    _
  $region7: #{attn2d_forward.1} parent=0 // pred_check_branch
    %11 = sbr.rel (0) target = $region9
  $region8: #{attn2d_forward.1} parent=0 // pred_region
    _
  $region9: #{attn2d_forward.1} parent=0 // pred_fallthru
    _
  // Predicated region
  $region10: #{attn2d_forward.1} parent=0 // pred_check
    _
  $region11: #{attn2d_forward.1} parent=0 // pred_check_branch
    %13 = sbr.rel (0) target = $region13
  $region12: #{attn2d_forward.1} parent=0 // pred_region
    _
  $region13: #{attn2d_forward.1} parent=0 // pred_fallthru
    _
  %v14 = vld [vmem:[%s2] sm:$0xff]
  %v15 = vld [vmem:[%s2 + $0x8] sm:$0xff]
  %v16 = vld [vmem:[%s2 + $0x10] sm:$0xff]
  %v17 = vld [vmem:[%s2 + $0x18] sm:$0xff]
  %v18 = vld [vmem:[%s2 + $0x20] sm:$0xff]
  %v19 = vld [vmem:[%s2 + $0x28] sm:$0xff]
  %v20 = vld [vmem:[%s2 + $0x30] sm:$0xff]
  %v21 = vld [vmem:[%s2 + $0x38] sm:$0xff]
  %v22 = vld [vmem:[%s2 + $0x40] sm:$0xff]
  %v23 = vld [vmem:[%s2 + $0x48] sm:$0xff]
  %v24 = vld [vmem:[%s2 + $0x50] sm:$0xff]
  %v25 = vld [vmem:[%s2 + $0x58] sm:$0xff]
  %v26 = vld [vmem:[%s2 + $0x60] sm:$0xff]
  %v27 = vld [vmem:[%s2 + $0x68] sm:$0xff]
  %v28 = vld [vmem:[%s2 + $0x70] sm:$0xff]
  %v29 = vld [vmem:[%s2 + $0x78] sm:$0xff]
  %v30 = vld [vmem:[%s2 + $0x80] sm:$0xff]
  %v31 = vld [vmem:[%s2 + $0x88] sm:$0xff]
  %v32 = vld [vmem:[%s2 + $0x90] sm:$0xff]
  %v33 = vld [vmem:[%s2 + $0x98] sm:$0xff]
  %v34 = vld [vmem:[%s2 + $0xa0] sm:$0xff]
  %v35 = vld [vmem:[%s2 + $0xa8] sm:$0xff]
  %v36 = vld [vmem:[%s2 + $0xb0] sm:$0xff]
  %v37 = vld [vmem:[%s2 + $0xb8] sm:$0xff]
  %v38 = vld [vmem:[%s2 + $0xc0] sm:$0xff]
  %v39 = vld [vmem:[%s2 + $0xc8] sm:$0xff]
  %v40 = vld [vmem:[%s2 + $0xd0] sm:$0xff]
  %v41 = vld [vmem:[%s2 + $0xd8] sm:$0xff]
  %v42 = vld [vmem:[%s2 + $0xe0] sm:$0xff]
  %v43 = vld [vmem:[%s2 + $0xe8] sm:$0xff]
  %v44 = vld [vmem:[%s2 + $0xf0] sm:$0xff]
  %v45 = vld [vmem:[%s2 + $0xf8] sm:$0xff]
  %v46 = vld [vmem:[%s2 + $0x100] sm:$0xff]
  %v47 = vld [vmem:[%s2 + $0x108] sm:$0xff]
  %v48 = vld [vmem:[%s2 + $0x110] sm:$0xff]
  %v49 = vld [vmem:[%s2 + $0x118] sm:$0xff]
  %v50 = vld [vmem:[%s2 + $0x120] sm:$0xff]
  %v51 = vld [vmem:[%s2 + $0x128] sm:$0xff]
  %v52 = vld [vmem:[%s2 + $0x130] sm:$0xff]
  %v53 = vld [vmem:[%s2 + $0x138] sm:$0xff]
  %v54 = vld [vmem:[%s2 + $0x140] sm:$0xff]
  %v55 = vld [vmem:[%s2 + $0x148] sm:$0xff]
  %v56 = vld [vmem:[%s2 + $0x150] sm:$0xff]
  %v57 = vld [vmem:[%s2 + $0x158] sm:$0xff]
  %v58 = vld [vmem:[%s2 + $0x160] sm:$0xff]
  %v59 = vld [vmem:[%s2 + $0x168] sm:$0xff]
  %v60 = vld [vmem:[%s2 + $0x170] sm:$0x3]
  %v61 = vld [vmem:[%s1] sm:$0x3]
  %v62 = vld [vmem:[%s1 + $0x8] sm:$0xff]
  %v63 = vld [vmem:[%s1 + $0x10] sm:$0xff]
  %v64 = vld [vmem:[%s1 + $0x18] sm:$0xff]
  %v65 = vld [vmem:[%s1 + $0x20] sm:$0xff]
  %v66 = vld [vmem:[%s1 + $0x28] sm:$0xff]
  %v67 = vld [vmem:[%s1 + $0x30] sm:$0xff]
  %v68 = vld [vmem:[%s1 + $0x38] sm:$0xff]
  %v69 = vld [vmem:[%s1 + $0x40] sm:$0xff]
  %v70 = vld [vmem:[%s1 + $0x48] sm:$0xff]
  %v71 = vld [vmem:[%s1 + $0x50] sm:$0xff]
  %v72 = vld [vmem:[%s1 + $0x58] sm:$0xff]
  %v73 = vld [vmem:[%s1 + $0x60] sm:$0xff]
  %v74 = vld [vmem:[%s1 + $0x68] sm:$0xff]
  %v75 = vld [vmem:[%s1 + $0x70] sm:$0xff]
  %v76 = vld [vmem:[%s1 + $0x78] sm:$0xff]
  %v77 = vld [vmem:[%s1 + $0x80] sm:$0xff]
  %v78 = vld [vmem:[%s1 + $0x88] sm:$0xff]
  %v79 = vld [vmem:[%s1 + $0x90] sm:$0xff]
  %v80 = vld [vmem:[%s0] sm:$0xff]
  %v81 = vld [vmem:[%s0 + $0x8] sm:$0xff]
  %v82 = vld [vmem:[%s0 + $0x10] sm:$0xff]
  %v83 = vld [vmem:[%s0 + $0x18] sm:$0xff]
  %v84 = vld [vmem:[%s0 + $0x20] sm:$0xff]
  %v85 = vld [vmem:[%s0 + $0x28] sm:$0xff]
  %v86 = vld [vmem:[%s0 + $0x30] sm:$0xff]
  %v87 = vld [vmem:[%s0 + $0x38] sm:$0xff]
  %v88 = vld [vmem:[%s0 + $0x40] sm:$0xff]
  %89 = vmatprep.subr.mxu0 0.0
  %90 = vmatpush1.msra.mxu0 %v29
  %91 = vmatprep.subr.mxu0 0.0
  %92 = vmatpush1.msra.mxu0 %v28
  %93 = vmatprep.subr.mxu0 0.0
  %94 = vmatpush1.msra.mxu0 %v27
  %95 = vmatprep.subr.mxu0 0.0
  %96 = vmatpush1.msra.mxu0 %v26
  %97 = vmatprep.subr.mxu0 0.0
  %98 = vmatpush1.msra.mxu0 %v25
  %99 = vmatprep.subr.mxu0 0.0
  %100 = vmatpush1.msra.mxu0 %v24
  %101 = vmatprep.subr.mxu0 0.0
  %102 = vmatpush1.msra.mxu0 %v23
  %103 = vmatprep.subr.mxu0 0.0
  %104 = vmatpush1.msra.mxu0 %v22
  %105 = vmatprep.subr.mxu0 0.0
  %106 = vmatpush1.msra.mxu0 %v21
  %107 = vmatprep.subr.mxu0 0.0
  %108 = vmatpush1.msra.mxu0 %v20
  %109 = vmatprep.subr.mxu0 0.0
  %110 = vmatpush1.msra.mxu0 %v19
  %111 = vmatprep.subr.mxu0 0.0
  %112 = vmatpush1.msra.mxu0 %v18
  %113 = vmatprep.subr.mxu0 0.0
  %114 = vmatpush1.msra.mxu0 %v17
  %115 = vmatprep.subr.mxu0 0.0
  %116 = vmatpush1.msra.mxu0 %v16
  %117 = vmatprep.subr.mxu0 0.0
  %118 = vmatpush1.msra.mxu0 %v15
  %119 = vmatprep.subr.mxu0 0.0
  %120 = vmatpush1.msra.mxu0 %v14
  %121 = vmatprep.subr.mxu0 0.0
  %122 = vmatpush2.msra.mxu0 0.0
  %123 = vmatprep.subr.mxu0 0.0
  %124 = vmatpush2.msra.mxu0 0.0
  %125 = vmatprep.subr.mxu0 0.0
  %126 = vmatpush2.msra.mxu0 0.0
  %127 = vmatprep.subr.mxu0 0.0
  %128 = vmatpush2.msra.mxu0 0.0
  %129 = vmatprep.subr.mxu0 0.0
  %130 = vmatpush2.msra.mxu0 0.0
  %131 = vmatprep.subr.mxu0 0.0
  %132 = vmatpush2.msra.mxu0 0.0
  %133 = vmatprep.subr.mxu0 0.0
  %134 = vmatpush2.msra.mxu0 0.0
  %135 = vmatprep.subr.mxu0 0.0
  %136 = vmatpush2.msra.mxu0 0.0
  %137 = vmatprep.subr.mxu0 0.0
  %138 = vmatpush2.msra.mxu0 0.0
  %139 = vmatprep.subr.mxu0 0.0
  %140 = vmatpush2.msra.mxu0 0.0
  %141 = vmatprep.subr.mxu0 0.0
  %142 = vmatpush2.msra.mxu0 0.0
  %143 = vmatprep.subr.mxu0 0.0
  %144 = vmatpush2.msra.mxu0 0.0
  %145 = vmatprep.subr.mxu0 0.0
  %146 = vmatpush2.msra.mxu0 0.0
  %147 = vmatprep.subr.mxu0 0.0
  %148 = vmatpush2.msra.mxu0 0.0
  %149 = vmatprep.subr.mxu0 0.0
  %150 = vmatpush2.msra.mxu0 0.0
  %151 = vmatprep.subr.mxu0 0.0
  %152 = vmatpush2.msra.mxu0 0.0
  %153 = vmatprep.mubr.f32.mxu0 0.0
  %154 = vmatmul.mubr.f32.gmra.mxu0 %v80
  %v155 = vpop.f32.mrf.mxu0
  %v156 = vadd.f32 0.0, %v155
  %v157 = vpop.f32.mrf.mxu0
  %158 = vmatprep.mubr.f32.mxu0 0.0
  %159 = vmatmul.mubr.f32.gmra.mxu0 %v81
  %v160 = vpop.f32.mrf.mxu0
  %v161 = vadd.f32 0.0, %v160
  %v162 = vpop.f32.mrf.mxu0
  %163 = vmatprep.mubr.f32.mxu0 0.0
  %164 = vmatmul.mubr.f32.gmra.mxu0 %v82
  %v165 = vpop.f32.mrf.mxu0
  %v166 = vadd.f32 0.0, %v165
  %v167 = vpop.f32.mrf.mxu0
  %168 = vmatprep.mubr.f32.mxu0 0.0
  %169 = vmatmul.mubr.f32.gmra.mxu0 %v83
  %v170 = vpop.f32.mrf.mxu0
  %v171 = vadd.f32 0.0, %v170
  %v172 = vpop.f32.mrf.mxu0
  %173 = vmatprep.mubr.f32.mxu0 0.0
  %174 = vmatmul.mubr.f32.gmra.mxu0 %v84
  %v175 = vpop.f32.mrf.mxu0
  %v176 = vadd.f32 0.0, %v175
  %v177 = vpop.f32.mrf.mxu0
  %178 = vmatprep.mubr.f32.mxu0 0.0
  %179 = vmatmul.mubr.f32.gmra.mxu0 %v85
  %v180 = vpop.f32.mrf.mxu0
  %v181 = vadd.f32 0.0, %v180
  %v182 = vpop.f32.mrf.mxu0
  %183 = vmatprep.mubr.f32.mxu0 0.0
  %184 = vmatmul.mubr.f32.gmra.mxu0 %v86
  %v185 = vpop.f32.mrf.mxu0
  %v186 = vadd.f32 0.0, %v185
  %v187 = vpop.f32.mrf.mxu0
  %188 = vmatprep.mubr.f32.mxu0 0.0
  %189 = vmatmul.mubr.f32.gmra.mxu0 %v87
  %v190 = vpop.f32.mrf.mxu0
  %v191 = vadd.f32 0.0, %v190
  %v192 = vpop.f32.mrf.mxu0
  %193 = vmatprep.mubr.f32.mxu0 0.0
  %194 = vmatmul.mubr.f32.gmra.mxu0 %v88
  %v195 = vpop.f32.mrf.mxu0
  %v196 = vadd.f32 0.0, %v195
  %v197 = vpop.f32.mrf.mxu0
  %198 = vdwg.mxu0
  %v199 = vmul.f32 %v62, 0.35355338
  %v200 = vmul.f32 %v63, 0.35355338
  %v201 = vmul.f32 %v64, 0.35355338
  %v202 = vmul.f32 %v65, 0.35355338
  %v203 = vmul.f32 %v66, 0.35355338
  %v204 = vmul.f32 %v67, 0.35355338
  %v205 = vmul.f32 %v68, 0.35355338
  %v206 = vmul.f32 %v69, 0.35355338
  %v207 = vmul.f32 %v70, 0.35355338
  %v208 = vadd.f32 %v156, %v71
  %v209 = vadd.f32 %v161, %v72
  %v210 = vadd.f32 %v166, %v73
  %v211 = vadd.f32 %v171, %v74
  %v212 = vadd.f32 %v176, %v75
  %v213 = vadd.f32 %v181, %v76
  %v214 = vadd.f32 %v186, %v77
  %v215 = vadd.f32 %v191, %v78
  %v216 = vadd.f32 %v196, %v79
  %v217 = vmul.f32 %v208, %v199
  %v218 = vmul.f32 %v209, %v200
  %v219 = vmul.f32 %v210, %v201
  %v220 = vmul.f32 %v211, %v202
  %v221 = vmul.f32 %v212, %v203
  %v222 = vmul.f32 %v213, %v204
  %v223 = vmul.f32 %v214, %v205
  %v224 = vmul.f32 %v215, %v206
  %v225 = vmul.f32 %v216, %v207
  %vm226 = vcmask 64512
  %v227 = vsel %vm226, %v217, 0.0
  %228 = vadd.xlane.f32.xlu0 %v227
  %v229 = vpop.xlane.xlu0 %228
  %v230 = vsel %vm226, %v218, 0.0
  %231 = vadd.xlane.f32.xlu0 %v230
  %v232 = vpop.xlane.xlu0 %231
  %v233 = vsel %vm226, %v219, 0.0
  %234 = vadd.xlane.f32.xlu0 %v233
  %v235 = vpop.xlane.xlu0 %234
  %v236 = vsel %vm226, %v220, 0.0
  %237 = vadd.xlane.f32.xlu0 %v236
  %v238 = vpop.xlane.xlu0 %237
  %v239 = vsel %vm226, %v221, 0.0
  %240 = vadd.xlane.f32.xlu0 %v239
  %v241 = vpop.xlane.xlu0 %240
  %v242 = vsel %vm226, %v222, 0.0
  %243 = vadd.xlane.f32.xlu0 %v242
  %v244 = vpop.xlane.xlu0 %243
  %v245 = vsel %vm226, %v223, 0.0
  %246 = vadd.xlane.f32.xlu0 %v245
  %v247 = vpop.xlane.xlu0 %246
  %v248 = vsel %vm226, %v224, 0.0
  %249 = vadd.xlane.f32.xlu0 %v248
  %v250 = vpop.xlane.xlu0 %249
  %v251 = vsel %vm226, %v225, 0.0
  %252 = vadd.xlane.f32.xlu0 %v251
  %v253 = vpop.xlane.xlu0 %252
  %vm254 = vcmp.gt.f32.partialorder %v49, 0.5
  %vm255 = vcmp.gt.f32.partialorder %v50, 0.5
  %vm256 = vcmp.gt.f32.partialorder %v51, 0.5
  %vm257 = vcmp.gt.f32.partialorder %v52, 0.5
  %vm258 = vcmp.gt.f32.partialorder %v53, 0.5
  %vm259 = vcmp.gt.f32.partialorder %v54, 0.5
  %vm260 = vcmp.gt.f32.partialorder %v55, 0.5
  %vm261 = vcmp.gt.f32.partialorder %v56, 0.5
  %vm262 = vcmp.gt.f32.partialorder %v57, 0.5
  %v263 = vsel %vm254, %v229, -1e+30
  %v264 = vsel %vm255, %v232, -1e+30
  %v265 = vsel %vm256, %v235, -1e+30
  %v266 = vsel %vm257, %v238, -1e+30
  %v267 = vsel %vm258, %v241, -1e+30
  %v268 = vsel %vm259, %v244, -1e+30
  %v269 = vsel %vm260, %v247, -1e+30
  %v270 = vsel %vm261, %v250, -1e+30
  %v271 = vsel %vm262, %v253, -1e+30
  %v272 = vsel %vm226, %v263, -inf
  %v273 = vsel %vm226, %v264, -inf
  %v274 = vsel %vm226, %v265, -inf
  %v275 = vsel %vm226, %v266, -inf
  %v276 = vsel %vm226, %v267, -inf
  %v277 = vmax.f32 %v272, %v276
  %v278 = vsel %vm226, %v268, -inf
  %v279 = vmax.f32 %v273, %v278
  %v280 = vsel %vm226, %v269, -inf
  %v281 = vmax.f32 %v274, %v280
  %v282 = vsel %vm226, %v270, -inf
  %v283 = vmax.f32 %v275, %v282
  %v284 = vsel %vm226, %v271, -inf
  %v285 = vmax.f32 %v277, %v284
  %v286 = vmax.f32 %v285, %v279
  %v287 = vmax.f32 %v281, %v283
  %v288 = vmax.f32 %v286, %v287
  %v289 = vrot.slane %v288, 4
  %v290 = vmax.f32 %v288, %v289
  %v291 = vrot.slane %v290, 2
  %v292 = vmax.f32 %v290, %v291
  %v293 = vrot.slane %v292, 1
  %v294 = vmax.f32 %v292, %v293
  %v295 = vmul.f32 %v49, %v294
  %v296 = vmul.f32 %v50, %v294
  %v297 = vmul.f32 %v51, %v294
  %v298 = vmul.f32 %v52, %v294
  %v299 = vmul.f32 %v53, %v294
  %v300 = vmul.f32 %v54, %v294
  %v301 = vmul.f32 %v55, %v294
  %v302 = vmul.f32 %v56, %v294
  %v303 = vmul.f32 %v57, %v294
  %v304 = vsel %vm226, %v295, 0.0
  %305 = vadd.xlane.f32.xlu0 %v304
  %v306 = vpop.xlane.xlu0 %305
  %v307 = vsel %vm226, %v296, 0.0
  %308 = vadd.xlane.f32.xlu0 %v307
  %v309 = vpop.xlane.xlu0 %308
  %v310 = vsel %vm226, %v297, 0.0
  %311 = vadd.xlane.f32.xlu0 %v310
  %v312 = vpop.xlane.xlu0 %311
  %v313 = vsel %vm226, %v298, 0.0
  %314 = vadd.xlane.f32.xlu0 %v313
  %v315 = vpop.xlane.xlu0 %314
  %v316 = vsel %vm226, %v299, 0.0
  %317 = vadd.xlane.f32.xlu0 %v316
  %v318 = vpop.xlane.xlu0 %317
  %v319 = vsel %vm226, %v300, 0.0
  %320 = vadd.xlane.f32.xlu0 %v319
  %v321 = vpop.xlane.xlu0 %320
  %v322 = vsel %vm226, %v301, 0.0
  %323 = vadd.xlane.f32.xlu0 %v322
  %v324 = vpop.xlane.xlu0 %323
  %v325 = vsel %vm226, %v302, 0.0
  %326 = vadd.xlane.f32.xlu0 %v325
  %v327 = vpop.xlane.xlu0 %326
  %v328 = vsel %vm226, %v303, 0.0
  %329 = vadd.xlane.f32.xlu0 %v328
  %v330 = vpop.xlane.xlu0 %329
  %v331 = vsub.f32 %v229, %v306
  %v332 = vsub.f32 %v232, %v309
  %v333 = vsub.f32 %v235, %v312
  %v334 = vsub.f32 %v238, %v315
  %v335 = vsub.f32 %v241, %v318
  %v336 = vsub.f32 %v244, %v321
  %v337 = vsub.f32 %v247, %v324
  %v338 = vsub.f32 %v250, %v327
  %v339 = vsub.f32 %v253, %v330
  %v340 = vmul.f32 %v331, 1.442695
  %v341 = vpow.pop %v340
  %v342 = vmul.f32 %v332, 1.442695
  %v343 = vpow.pop %v342
  %v344 = vmul.f32 %v333, 1.442695
  %v345 = vpow.pop %v344
  %v346 = vmul.f32 %v334, 1.442695
  %v347 = vpow.pop %v346
  %v348 = vmul.f32 %v335, 1.442695
  %v349 = vpow.pop %v348
  %v350 = vmul.f32 %v336, 1.442695
  %v351 = vpow.pop %v350
  %v352 = vmul.f32 %v337, 1.442695
  %v353 = vpow.pop %v352
  %v354 = vmul.f32 %v338, 1.442695
  %v355 = vpow.pop %v354
  %v356 = vmul.f32 %v339, 1.442695
  %v357 = vpow.pop %v356
  %v358 = vmul.f32 %v341, %v156
  %v359 = vmul.f32 %v343, %v161
  %v360 = vmul.f32 %v345, %v166
  %v361 = vmul.f32 %v347, %v171
  %v362 = vmul.f32 %v349, %v176
  %v363 = vmul.f32 %v351, %v181
  %v364 = vmul.f32 %v353, %v186
  %v365 = vmul.f32 %v355, %v191
  %v366 = vmul.f32 %v357, %v196
  %376 = vrot.lane.b32.xlu0 %v358, 120
  %v377 = vpop.permute.xlu0 %376
  %378 = vrot.lane.b32.xlu0 %v359, 120
  %v379 = vpop.permute.xlu0 %378
  %380 = vrot.lane.b32.xlu0 %v360, 120
  %v381 = vpop.permute.xlu0 %380
  %382 = vrot.lane.b32.xlu0 %v361, 120
  %v383 = vpop.permute.xlu0 %382
  %384 = vrot.lane.b32.xlu0 %v362, 120
  %v385 = vpop.permute.xlu0 %384
  %386 = vrot.lane.b32.xlu0 %v363, 120
  %v387 = vpop.permute.xlu0 %386
  %388 = vrot.lane.b32.xlu0 %v364, 120
  %v389 = vpop.permute.xlu0 %388
  %390 = vrot.lane.b32.xlu0 %v365, 120
  %v391 = vpop.permute.xlu0 %390
  %392 = vrot.lane.b32.xlu0 %v366, 120
  %v393 = vpop.permute.xlu0 %392
  %v403 = vsel %vm226, %v377, %v341
  %v404 = vsel %vm226, %v379, %v343
  %v405 = vsel %vm226, %v381, %v345
  %v406 = vsel %vm226, %v383, %v347
  %v407 = vsel %vm226, %v385, %v349
  %v408 = vsel %vm226, %v387, %v351
  %v409 = vsel %vm226, %v389, %v353
  %v410 = vsel %vm226, %v391, %v355
  %v411 = vsel %vm226, %v393, %v357
  %vm412 = vcmask 588800
  %v414 = vsel %vm412, %v58, 0
  %416 = vmatprep.subr.mxu0 0.0
  %417 = vmatpush1.msra.mxu0 0.0
  %418 = vmatprep.subr.mxu0 0.0
  %419 = vmatpush1.msra.mxu0 0.0
  %420 = vmatprep.subr.mxu0 0.0
  %421 = vmatpush1.msra.mxu0 0.0
  %422 = vmatprep.subr.mxu0 0.0
  %423 = vmatpush1.msra.mxu0 0.0
  %424 = vmatprep.subr.mxu0 0.0
  %425 = vmatpush1.msra.mxu0 0.0
  %426 = vmatprep.subr.mxu0 0.0
  %427 = vmatpush1.msra.mxu0 0.0
  %428 = vmatprep.subr.mxu0 0.0
  %429 = vmatpush1.msra.mxu0 0.0
  %430 = vmatprep.subr.mxu0 0.0
  %431 = vmatpush1.msra.mxu0 %v411
  %432 = vmatprep.subr.mxu0 0.0
  %433 = vmatpush1.msra.mxu0 %v410
  %434 = vmatprep.subr.mxu0 0.0
  %435 = vmatpush1.msra.mxu0 %v409
  %436 = vmatprep.subr.mxu0 0.0
  %437 = vmatpush1.msra.mxu0 %v408
  %438 = vmatprep.subr.mxu0 0.0
  %439 = vmatpush1.msra.mxu0 %v407
  %440 = vmatprep.subr.mxu0 0.0
  %441 = vmatpush1.msra.mxu0 %v406
  %442 = vmatprep.subr.mxu0 0.0
  %443 = vmatpush1.msra.mxu0 %v405
  %444 = vmatprep.subr.mxu0 0.0
  %445 = vmatpush1.msra.mxu0 %v404
  %446 = vmatprep.subr.mxu0 0.0
  %447 = vmatpush1.msra.mxu0 %v403
  %448 = vmatprep.subr.mxu0 0.0
  %449 = vmatpush2.msra.mxu0 0.0
  %450 = vmatprep.subr.mxu0 0.0
  %451 = vmatpush2.msra.mxu0 0.0
  %452 = vmatprep.subr.mxu0 0.0
  %453 = vmatpush2.msra.mxu0 0.0
  %454 = vmatprep.subr.mxu0 0.0
  %455 = vmatpush2.msra.mxu0 0.0
  %456 = vmatprep.subr.mxu0 0.0
  %457 = vmatpush2.msra.mxu0 0.0
  %458 = vmatprep.subr.mxu0 0.0
  %459 = vmatpush2.msra.mxu0 0.0
  %460 = vmatprep.subr.mxu0 0.0
  %461 = vmatpush2.msra.mxu0 0.0
  %462 = vmatprep.subr.mxu0 0.0
  %463 = vmatpush2.msra.mxu0 0.0
  %464 = vmatprep.subr.mxu0 0.0
  %465 = vmatpush2.msra.mxu0 0.0
  %466 = vmatprep.subr.mxu0 0.0
  %467 = vmatpush2.msra.mxu0 0.0
  %468 = vmatprep.subr.mxu0 0.0
  %469 = vmatpush2.msra.mxu0 0.0
  %470 = vmatprep.subr.mxu0 0.0
  %471 = vmatpush2.msra.mxu0 0.0
  %472 = vmatprep.subr.mxu0 0.0
  %473 = vmatpush2.msra.mxu0 0.0
  %474 = vmatprep.subr.mxu0 0.0
  %475 = vmatpush2.msra.mxu0 0.0
  %476 = vmatprep.subr.mxu0 0.0
  %477 = vmatpush2.msra.mxu0 0.0
  %478 = vmatprep.subr.mxu0 0.0
  %479 = vmatpush2.msra.mxu0 0.0
  %480 = vmatprep.mubr.f32.mxu0 0.0
  %481 = vmatmul.mubr.f32.gmra.mxu0 %v414
  %v482 = vpop.f32.mrf.mxu0
  %v483 = vadd.f32 0.0, %v482
  %v484 = vpop.f32.mrf.mxu0
  %485 = vdwg.mxu0
  %v486 = vrcp.pop %v483
  %488 = vset.pattern.permute.xlu0 8
  %489 = vperm.xlu0 %488, %v486
  %v490 = vpop.permute.xlu0 %489
  %v492 = vmul.f32 %v483, %v490
  %494 = vrot.lane.b32.xlu0 %v492, 8
  %v495 = vpop.permute.xlu0 %494
  %497 = vrot.lane.b32.xlu0 %v492, 16
  %v498 = vpop.permute.xlu0 %497
  %500 = vrot.lane.b32.xlu0 %v492, 24
  %v501 = vpop.permute.xlu0 %500
  %v503 = vsel %vm226, %v492, %v495
  %vm504 = vcmask 130048
  %v505 = vsel %vm504, %v503, %v498
  %vm506 = vcmask 195584
  %v507 = vsel %vm506, %v505, %v501
  %v508 = vmul.f32 %v507, %v59
  %v510 = vsel %vm226, %v60, 0
  %512 = vmatprep.subr.mxu0 0.0
  %513 = vmatpush1.msra.mxu0 0.0
  %514 = vmatprep.subr.mxu0 0.0
  %515 = vmatpush1.msra.mxu0 0.0
  %516 = vmatprep.subr.mxu0 0.0
  %517 = vmatpush1.msra.mxu0 0.0
  %518 = vmatprep.subr.mxu0 0.0
  %519 = vmatpush1.msra.mxu0 0.0
  %520 = vmatprep.subr.mxu0 0.0
  %521 = vmatpush1.msra.mxu0 0.0
  %522 = vmatprep.subr.mxu0 0.0
  %523 = vmatpush1.msra.mxu0 0.0
  %524 = vmatprep.subr.mxu0 0.0
  %525 = vmatpush1.msra.mxu0 0.0
  %526 = vmatprep.subr.mxu0 0.0
  %527 = vmatpush1.msra.mxu0 0.0
  %528 = vmatprep.subr.mxu0 0.0
  %529 = vmatpush1.msra.mxu0 0.0
  %530 = vmatprep.subr.mxu0 0.0
  %531 = vmatpush1.msra.mxu0 0.0
  %532 = vmatprep.subr.mxu0 0.0
  %533 = vmatpush1.msra.mxu0 0.0
  %534 = vmatprep.subr.mxu0 0.0
  %535 = vmatpush1.msra.mxu0 0.0
  %536 = vmatprep.subr.mxu0 0.0
  %537 = vmatpush1.msra.mxu0 0.0
  %538 = vmatprep.subr.mxu0 0.0
  %539 = vmatpush1.msra.mxu0 0.0
  %540 = vmatprep.subr.mxu0 0.0
  %541 = vmatpush1.msra.mxu0 0.0
  %542 = vmatprep.subr.mxu0 0.0
  %543 = vmatpush1.msra.mxu0 %v508
  %544 = vmatprep.subr.mxu0 0.0
  %545 = vmatpush2.msra.mxu0 0.0
  %546 = vmatprep.subr.mxu0 0.0
  %547 = vmatpush2.msra.mxu0 0.0
  %548 = vmatprep.subr.mxu0 0.0
  %549 = vmatpush2.msra.mxu0 0.0
  %550 = vmatprep.subr.mxu0 0.0
  %551 = vmatpush2.msra.mxu0 0.0
  %552 = vmatprep.subr.mxu0 0.0
  %553 = vmatpush2.msra.mxu0 0.0
  %554 = vmatprep.subr.mxu0 0.0
  %555 = vmatpush2.msra.mxu0 0.0
  %556 = vmatprep.subr.mxu0 0.0
  %557 = vmatpush2.msra.mxu0 0.0
  %558 = vmatprep.subr.mxu0 0.0
  %559 = vmatpush2.msra.mxu0 0.0
  %560 = vmatprep.subr.mxu0 0.0
  %561 = vmatpush2.msra.mxu0 0.0
  %562 = vmatprep.subr.mxu0 0.0
  %563 = vmatpush2.msra.mxu0 0.0
  %564 = vmatprep.subr.mxu0 0.0
  %565 = vmatpush2.msra.mxu0 0.0
  %566 = vmatprep.subr.mxu0 0.0
  %567 = vmatpush2.msra.mxu0 0.0
  %568 = vmatprep.subr.mxu0 0.0
  %569 = vmatpush2.msra.mxu0 0.0
  %570 = vmatprep.subr.mxu0 0.0
  %571 = vmatpush2.msra.mxu0 0.0
  %572 = vmatprep.subr.mxu0 0.0
  %573 = vmatpush2.msra.mxu0 0.0
  %574 = vmatprep.subr.mxu0 0.0
  %575 = vmatpush2.msra.mxu0 0.0
  %576 = vmatprep.mubr.f32.mxu0 0.0
  %577 = vmatmul.mubr.f32.gmra.mxu0 %v510
  %v578 = vpop.f32.mrf.mxu0
  %v579 = vadd.f32 0.0, %v578
  %v580 = vpop.f32.mrf.mxu0
  %581 = vdwg.mxu0
  %vm582 = vcmask 261120
  %v584 = vsel %vm582, %v579, 0
  %586 = vmatprep.subr.mxu0 0.0
  %587 = vmatpush1.msra.mxu0 0.0
  %588 = vmatprep.subr.mxu0 0.0
  %589 = vmatpush1.msra.mxu0 0.0
  %590 = vmatprep.subr.mxu0 0.0
  %591 = vmatpush1.msra.mxu0 0.0
  %592 = vmatprep.subr.mxu0 0.0
  %593 = vmatpush1.msra.mxu0 0.0
  %594 = vmatprep.subr.mxu0 0.0
  %595 = vmatpush1.msra.mxu0 0.0
  %596 = vmatprep.subr.mxu0 0.0
  %597 = vmatpush1.msra.mxu0 0.0
  %598 = vmatprep.subr.mxu0 0.0
  %599 = vmatpush1.msra.mxu0 0.0
  %600 = vmatprep.subr.mxu0 0.0
  %601 = vmatpush1.msra.mxu0 0.0
  %602 = vmatprep.subr.mxu0 0.0
  %603 = vmatpush1.msra.mxu0 0.0
  %604 = vmatprep.subr.mxu0 0.0
  %605 = vmatpush1.msra.mxu0 0.0
  %606 = vmatprep.subr.mxu0 0.0
  %607 = vmatpush1.msra.mxu0 0.0
  %608 = vmatprep.subr.mxu0 0.0
  %609 = vmatpush1.msra.mxu0 0.0
  %610 = vmatprep.subr.mxu0 0.0
  %611 = vmatpush1.msra.mxu0 %v33
  %612 = vmatprep.subr.mxu0 0.0
  %613 = vmatpush1.msra.mxu0 %v32
  %614 = vmatprep.subr.mxu0 0.0
  %615 = vmatpush1.msra.mxu0 %v31
  %616 = vmatprep.subr.mxu0 0.0
  %617 = vmatpush1.msra.mxu0 %v30
  %618 = vmatprep.subr.mxu0 0.0
  %619 = vmatpush2.msra.mxu0 0.0
  %620 = vmatprep.subr.mxu0 0.0
  %621 = vmatpush2.msra.mxu0 0.0
  %622 = vmatprep.subr.mxu0 0.0
  %623 = vmatpush2.msra.mxu0 0.0
  %624 = vmatprep.subr.mxu0 0.0
  %625 = vmatpush2.msra.mxu0 0.0
  %626 = vmatprep.subr.mxu0 0.0
  %627 = vmatpush2.msra.mxu0 0.0
  %628 = vmatprep.subr.mxu0 0.0
  %629 = vmatpush2.msra.mxu0 0.0
  %630 = vmatprep.subr.mxu0 0.0
  %631 = vmatpush2.msra.mxu0 0.0
  %632 = vmatprep.subr.mxu0 0.0
  %633 = vmatpush2.msra.mxu0 0.0
  %634 = vmatprep.subr.mxu0 0.0
  %635 = vmatpush2.msra.mxu0 0.0
  %636 = vmatprep.subr.mxu0 0.0
  %637 = vmatpush2.msra.mxu0 0.0
  %638 = vmatprep.subr.mxu0 0.0
  %639 = vmatpush2.msra.mxu0 0.0
  %640 = vmatprep.subr.mxu0 0.0
  %641 = vmatpush2.msra.mxu0 0.0
  %642 = vmatprep.subr.mxu0 0.0
  %643 = vmatpush2.msra.mxu0 0.0
  %644 = vmatprep.subr.mxu0 0.0
  %645 = vmatpush2.msra.mxu0 0.0
  %646 = vmatprep.subr.mxu0 0.0
  %647 = vmatpush2.msra.mxu0 0.0
  %648 = vmatprep.subr.mxu0 0.0
  %649 = vmatpush2.msra.mxu0 0.0
  %650 = vmatprep.mubr.f32.mxu0 0.0
  %651 = vmatmul.mubr.f32.gmra.mxu0 %v584
  %v652 = vpop.f32.mrf.mxu0
  %v653 = vadd.f32 0.0, %v652
  %v654 = vpop.f32.mrf.mxu0
  %655 = vdwg.mxu0
  %v657 = vsel %vm582, %v653, 0
  %659 = vmatprep.subr.mxu0 0.0
  %660 = vmatpush1.msra.mxu0 0.0
  %661 = vmatprep.subr.mxu0 0.0
  %662 = vmatpush1.msra.mxu0 0.0
  %663 = vmatprep.subr.mxu0 0.0
  %664 = vmatpush1.msra.mxu0 0.0
  %665 = vmatprep.subr.mxu0 0.0
  %666 = vmatpush1.msra.mxu0 0.0
  %667 = vmatprep.subr.mxu0 0.0
  %668 = vmatpush1.msra.mxu0 0.0
  %669 = vmatprep.subr.mxu0 0.0
  %670 = vmatpush1.msra.mxu0 0.0
  %671 = vmatprep.subr.mxu0 0.0
  %672 = vmatpush1.msra.mxu0 0.0
  %673 = vmatprep.subr.mxu0 0.0
  %674 = vmatpush1.msra.mxu0 0.0
  %675 = vmatprep.subr.mxu0 0.0
  %676 = vmatpush1.msra.mxu0 0.0
  %677 = vmatprep.subr.mxu0 0.0
  %678 = vmatpush1.msra.mxu0 0.0
  %679 = vmatprep.subr.mxu0 0.0
  %680 = vmatpush1.msra.mxu0 0.0
  %681 = vmatprep.subr.mxu0 0.0
  %682 = vmatpush1.msra.mxu0 0.0
  %683 = vmatprep.subr.mxu0 0.0
  %684 = vmatpush1.msra.mxu0 %v37
  %685 = vmatprep.subr.mxu0 0.0
  %686 = vmatpush1.msra.mxu0 %v36
  %687 = vmatprep.subr.mxu0 0.0
  %688 = vmatpush1.msra.mxu0 %v35
  %689 = vmatprep.subr.mxu0 0.0
  %690 = vmatpush1.msra.mxu0 %v34
  %691 = vmatprep.subr.mxu0 0.0
  %692 = vmatpush2.msra.mxu0 0.0
  %693 = vmatprep.subr.mxu0 0.0
  %694 = vmatpush2.msra.mxu0 0.0
  %695 = vmatprep.subr.mxu0 0.0
  %696 = vmatpush2.msra.mxu0 0.0
  %697 = vmatprep.subr.mxu0 0.0
  %698 = vmatpush2.msra.mxu0 0.0
  %699 = vmatprep.subr.mxu0 0.0
  %700 = vmatpush2.msra.mxu0 0.0
  %701 = vmatprep.subr.mxu0 0.0
  %702 = vmatpush2.msra.mxu0 0.0
  %703 = vmatprep.subr.mxu0 0.0
  %704 = vmatpush2.msra.mxu0 0.0
  %705 = vmatprep.subr.mxu0 0.0
  %706 = vmatpush2.msra.mxu0 0.0
  %707 = vmatprep.subr.mxu0 0.0
  %708 = vmatpush2.msra.mxu0 0.0
  %709 = vmatprep.subr.mxu0 0.0
  %710 = vmatpush2.msra.mxu0 0.0
  %711 = vmatprep.subr.mxu0 0.0
  %712 = vmatpush2.msra.mxu0 0.0
  %713 = vmatprep.subr.mxu0 0.0
  %714 = vmatpush2.msra.mxu0 0.0
  %715 = vmatprep.subr.mxu0 0.0
  %716 = vmatpush2.msra.mxu0 0.0
  %717 = vmatprep.subr.mxu0 0.0
  %718 = vmatpush2.msra.mxu0 0.0
  %719 = vmatprep.subr.mxu0 0.0
  %720 = vmatpush2.msra.mxu0 0.0
  %721 = vmatprep.subr.mxu0 0.0
  %722 = vmatpush2.msra.mxu0 0.0
  %723 = vmatprep.mubr.f32.mxu0 0.0
  %724 = vmatmul.mubr.f32.gmra.mxu0 %v657
  %v725 = vpop.f32.mrf.mxu0
  %v726 = vadd.f32 0.0, %v725
  %v727 = vpop.f32.mrf.mxu0
  %728 = vdwg.mxu0
  %v729 = vmax.f32 %v726, 0.0
  %v731 = vsel %vm504, %v729, 0
  %733 = vmatprep.subr.mxu0 0.0
  %734 = vmatpush1.msra.mxu0 0.0
  %735 = vmatprep.subr.mxu0 0.0
  %736 = vmatpush1.msra.mxu0 0.0
  %737 = vmatprep.subr.mxu0 0.0
  %738 = vmatpush1.msra.mxu0 0.0
  %739 = vmatprep.subr.mxu0 0.0
  %740 = vmatpush1.msra.mxu0 0.0
  %741 = vmatprep.subr.mxu0 0.0
  %742 = vmatpush1.msra.mxu0 0.0
  %743 = vmatprep.subr.mxu0 0.0
  %744 = vmatpush1.msra.mxu0 0.0
  %745 = vmatprep.subr.mxu0 0.0
  %746 = vmatpush1.msra.mxu0 0.0
  %747 = vmatprep.subr.mxu0 0.0
  %748 = vmatpush1.msra.mxu0 0.0
  %749 = vmatprep.subr.mxu0 0.0
  %750 = vmatpush1.msra.mxu0 0.0
  %751 = vmatprep.subr.mxu0 0.0
  %752 = vmatpush1.msra.mxu0 0.0
  %753 = vmatprep.subr.mxu0 0.0
  %754 = vmatpush1.msra.mxu0 0.0
  %755 = vmatprep.subr.mxu0 0.0
  %756 = vmatpush1.msra.mxu0 0.0
  %757 = vmatprep.subr.mxu0 0.0
  %758 = vmatpush1.msra.mxu0 0.0
  %759 = vmatprep.subr.mxu0 0.0
  %760 = vmatpush1.msra.mxu0 0.0
  %761 = vmatprep.subr.mxu0 0.0
  %762 = vmatpush1.msra.mxu0 %v39
  %763 = vmatprep.subr.mxu0 0.0
  %764 = vmatpush1.msra.mxu0 %v38
  %765 = vmatprep.subr.mxu0 0.0
  %766 = vmatpush2.msra.mxu0 0.0
  %767 = vmatprep.subr.mxu0 0.0
  %768 = vmatpush2.msra.mxu0 0.0
  %769 = vmatprep.subr.mxu0 0.0
  %770 = vmatpush2.msra.mxu0 0.0
  %771 = vmatprep.subr.mxu0 0.0
  %772 = vmatpush2.msra.mxu0 0.0
  %773 = vmatprep.subr.mxu0 0.0
  %774 = vmatpush2.msra.mxu0 0.0
  %775 = vmatprep.subr.mxu0 0.0
  %776 = vmatpush2.msra.mxu0 0.0
  %777 = vmatprep.subr.mxu0 0.0
  %778 = vmatpush2.msra.mxu0 0.0
  %779 = vmatprep.subr.mxu0 0.0
  %780 = vmatpush2.msra.mxu0 0.0
  %781 = vmatprep.subr.mxu0 0.0
  %782 = vmatpush2.msra.mxu0 0.0
  %783 = vmatprep.subr.mxu0 0.0
  %784 = vmatpush2.msra.mxu0 0.0
  %785 = vmatprep.subr.mxu0 0.0
  %786 = vmatpush2.msra.mxu0 0.0
  %787 = vmatprep.subr.mxu0 0.0
  %788 = vmatpush2.msra.mxu0 0.0
  %789 = vmatprep.subr.mxu0 0.0
  %790 = vmatpush2.msra.mxu0 0.0
  %791 = vmatprep.subr.mxu0 0.0
  %792 = vmatpush2.msra.mxu0 0.0
  %793 = vmatprep.subr.mxu0 0.0
  %794 = vmatpush2.msra.mxu0 0.0
  %795 = vmatprep.subr.mxu0 0.0
  %796 = vmatpush2.msra.mxu0 0.0
  %797 = vmatprep.mubr.f32.mxu0 0.0
  %798 = vmatmul.mubr.f32.gmra.mxu0 %v731
  %v799 = vpop.f32.mrf.mxu0
  %v800 = vadd.f32 0.0, %v799
  %v801 = vpop.f32.mrf.mxu0
  %802 = vdwg.mxu0
  %v803 = vmul.f32 %v61, 0.35355338
  %v804 = vadd.f32 %v653, %v803
  %vm805 = vcmask 254976
  %v806 = vsel %vm805, %v804, 0.0
  %807 = vadd.xlane.f32.xlu0 %v806
  %v808 = vpop.xlane.xlu0 %807
  %v809 = vrcp.pop 32.0
  %v810 = vmul.f32 %v808, %v809
  %v811 = vsub.f32 %v804, %v810
  %v812 = vmul.f32 %v811, %v811
  %v813 = vsel %vm805, %v812, 0.0
  %814 = vadd.xlane.f32.xlu0 %v813
  %v815 = vpop.xlane.xlu0 %814
  %v816 = vmul.f32 %v815, %v809
  %v817 = vadd.f32 %v816, 1e-05
  %v818 = vrsqrt.pop %v817
  %v819 = vmul.f32 %v811, %v818
  %v820 = vlaneseq
  %v821 = vshrl.u32 %v820, 7
  %v822 = vsub.s32 2, %v821
  %v823 = vrot.slane %v48, %v822
  %v824 = vmul.f32 %v819, %v823
  %v825 = vlaneseq
  %v826 = vshrl.u32 %v825, 7
  %v827 = vsub.s32 3, %v826
  %v828 = vrot.slane %v48, %v827
  %v829 = vadd.f32 %v824, %v828
  %v830 = vlaneseq
  %v831 = vshrl.u32 %v830, 7
  %v832 = vsub.s32 0, %v831
  %v833 = vrot.slane %v48, %v832
  %v835 = vsel %vm582, %v829, 0
  %837 = vmatprep.subr.mxu0 0.0
  %838 = vmatpush1.msra.mxu0 0.0
  %839 = vmatprep.subr.mxu0 0.0
  %840 = vmatpush1.msra.mxu0 0.0
  %841 = vmatprep.subr.mxu0 0.0
  %842 = vmatpush1.msra.mxu0 0.0
  %843 = vmatprep.subr.mxu0 0.0
  %844 = vmatpush1.msra.mxu0 0.0
  %845 = vmatprep.subr.mxu0 0.0
  %846 = vmatpush1.msra.mxu0 0.0
  %847 = vmatprep.subr.mxu0 0.0
  %848 = vmatpush1.msra.mxu0 0.0
  %849 = vmatprep.subr.mxu0 0.0
  %850 = vmatpush1.msra.mxu0 0.0
  %851 = vmatprep.subr.mxu0 0.0
  %852 = vmatpush1.msra.mxu0 0.0
  %853 = vmatprep.subr.mxu0 0.0
  %854 = vmatpush1.msra.mxu0 0.0
  %855 = vmatprep.subr.mxu0 0.0
  %856 = vmatpush1.msra.mxu0 0.0
  %857 = vmatprep.subr.mxu0 0.0
  %858 = vmatpush1.msra.mxu0 0.0
  %859 = vmatprep.subr.mxu0 0.0
  %860 = vmatpush1.msra.mxu0 0.0
  %861 = vmatprep.subr.mxu0 0.0
  %862 = vmatpush1.msra.mxu0 %v43
  %863 = vmatprep.subr.mxu0 0.0
  %864 = vmatpush1.msra.mxu0 %v42
  %865 = vmatprep.subr.mxu0 0.0
  %866 = vmatpush1.msra.mxu0 %v41
  %867 = vmatprep.subr.mxu0 0.0
  %868 = vmatpush1.msra.mxu0 %v40
  %869 = vmatprep.subr.mxu0 0.0
  %870 = vmatpush2.msra.mxu0 0.0
  %871 = vmatprep.subr.mxu0 0.0
  %872 = vmatpush2.msra.mxu0 0.0
  %873 = vmatprep.subr.mxu0 0.0
  %874 = vmatpush2.msra.mxu0 0.0
  %875 = vmatprep.subr.mxu0 0.0
  %876 = vmatpush2.msra.mxu0 0.0
  %877 = vmatprep.subr.mxu0 0.0
  %878 = vmatpush2.msra.mxu0 0.0
  %879 = vmatprep.subr.mxu0 0.0
  %880 = vmatpush2.msra.mxu0 0.0
  %881 = vmatprep.subr.mxu0 0.0
  %882 = vmatpush2.msra.mxu0 0.0
  %883 = vmatprep.subr.mxu0 0.0
  %884 = vmatpush2.msra.mxu0 0.0
  %885 = vmatprep.subr.mxu0 0.0
  %886 = vmatpush2.msra.mxu0 0.0
  %887 = vmatprep.subr.mxu0 0.0
  %888 = vmatpush2.msra.mxu0 0.0
  %889 = vmatprep.subr.mxu0 0.0
  %890 = vmatpush2.msra.mxu0 0.0
  %891 = vmatprep.subr.mxu0 0.0
  %892 = vmatpush2.msra.mxu0 0.0
  %893 = vmatprep.subr.mxu0 0.0
  %894 = vmatpush2.msra.mxu0 0.0
  %895 = vmatprep.subr.mxu0 0.0
  %896 = vmatpush2.msra.mxu0 0.0
  %897 = vmatprep.subr.mxu0 0.0
  %898 = vmatpush2.msra.mxu0 0.0
  %899 = vmatprep.subr.mxu0 0.0
  %900 = vmatpush2.msra.mxu0 0.0
  %901 = vmatprep.mubr.f32.mxu0 0.0
  %902 = vmatmul.mubr.f32.gmra.mxu0 %v835
  %v903 = vpop.f32.mrf.mxu0
  %v904 = vadd.f32 %v833, %v903
  %v905 = vpop.f32.mrf.mxu0
  %906 = vdwg.mxu0
  %v907 = vmax.f32 %v904, 0.0
  %v908 = vlaneseq
  %v909 = vshrl.u32 %v908, 7
  %v910 = vsub.s32 1, %v909
  %v911 = vrot.slane %v48, %v910
  %v913 = vsel %vm582, %v907, 0
  %915 = vmatprep.subr.mxu0 0.0
  %916 = vmatpush1.msra.mxu0 0.0
  %917 = vmatprep.subr.mxu0 0.0
  %918 = vmatpush1.msra.mxu0 0.0
  %919 = vmatprep.subr.mxu0 0.0
  %920 = vmatpush1.msra.mxu0 0.0
  %921 = vmatprep.subr.mxu0 0.0
  %922 = vmatpush1.msra.mxu0 0.0
  %923 = vmatprep.subr.mxu0 0.0
  %924 = vmatpush1.msra.mxu0 0.0
  %925 = vmatprep.subr.mxu0 0.0
  %926 = vmatpush1.msra.mxu0 0.0
  %927 = vmatprep.subr.mxu0 0.0
  %928 = vmatpush1.msra.mxu0 0.0
  %929 = vmatprep.subr.mxu0 0.0
  %930 = vmatpush1.msra.mxu0 0.0
  %931 = vmatprep.subr.mxu0 0.0
  %932 = vmatpush1.msra.mxu0 0.0
  %933 = vmatprep.subr.mxu0 0.0
  %934 = vmatpush1.msra.mxu0 0.0
  %935 = vmatprep.subr.mxu0 0.0
  %936 = vmatpush1.msra.mxu0 0.0
  %937 = vmatprep.subr.mxu0 0.0
  %938 = vmatpush1.msra.mxu0 0.0
  %939 = vmatprep.subr.mxu0 0.0
  %940 = vmatpush1.msra.mxu0 %v47
  %941 = vmatprep.subr.mxu0 0.0
  %942 = vmatpush1.msra.mxu0 %v46
  %943 = vmatprep.subr.mxu0 0.0
  %944 = vmatpush1.msra.mxu0 %v45
  %945 = vmatprep.subr.mxu0 0.0
  %946 = vmatpush1.msra.mxu0 %v44
  %947 = vmatprep.subr.mxu0 0.0
  %948 = vmatpush2.msra.mxu0 0.0
  %949 = vmatprep.subr.mxu0 0.0
  %950 = vmatpush2.msra.mxu0 0.0
  %951 = vmatprep.subr.mxu0 0.0
  %952 = vmatpush2.msra.mxu0 0.0
  %953 = vmatprep.subr.mxu0 0.0
  %954 = vmatpush2.msra.mxu0 0.0
  %955 = vmatprep.subr.mxu0 0.0
  %956 = vmatpush2.msra.mxu0 0.0
  %957 = vmatprep.subr.mxu0 0.0
  %958 = vmatpush2.msra.mxu0 0.0
  %959 = vmatprep.subr.mxu0 0.0
  %960 = vmatpush2.msra.mxu0 0.0
  %961 = vmatprep.subr.mxu0 0.0
  %962 = vmatpush2.msra.mxu0 0.0
  %963 = vmatprep.subr.mxu0 0.0
  %964 = vmatpush2.msra.mxu0 0.0
  %965 = vmatprep.subr.mxu0 0.0
  %966 = vmatpush2.msra.mxu0 0.0
  %967 = vmatprep.subr.mxu0 0.0
  %968 = vmatpush2.msra.mxu0 0.0
  %969 = vmatprep.subr.mxu0 0.0
  %970 = vmatpush2.msra.mxu0 0.0
  %971 = vmatprep.subr.mxu0 0.0
  %972 = vmatpush2.msra.mxu0 0.0
  %973 = vmatprep.subr.mxu0 0.0
  %974 = vmatpush2.msra.mxu0 0.0
  %975 = vmatprep.subr.mxu0 0.0
  %976 = vmatpush2.msra.mxu0 0.0
  %977 = vmatprep.subr.mxu0 0.0
  %978 = vmatpush2.msra.mxu0 0.0
  %979 = vmatprep.mubr.f32.mxu0 0.0
  %980 = vmatmul.mubr.f32.gmra.mxu0 %v913
  %v981 = vpop.f32.mrf.mxu0
  %v982 = vadd.f32 %v911, %v981
  %v983 = vpop.f32.mrf.mxu0
  %984 = vdwg.mxu0
  %v985 = vadd.f32 %v982, %v829
  %v986 = vsel %vm805, %v985, 0.0
  %987 = vadd.xlane.f32.xlu0 %v986
  %v988 = vpop.xlane.xlu0 %987
  %v989 = vmul.f32 %v988, %v809
  %v990 = vsub.f32 %v985, %v989
  %v991 = vmul.f32 %v990, %v990
  %v992 = vsel %vm805, %v991, 0.0
  %993 = vadd.xlane.f32.xlu0 %v992
  %v994 = vpop.xlane.xlu0 %993
  %v995 = vmul.f32 %v994, %v809
  %v996 = vadd.f32 %v995, 1e-05
  %v997 = vrsqrt.pop %v996
  %v998 = vmul.f32 %v990, %v997
  %v999 = vlaneseq
  %v1000 = vshrl.u32 %v999, 7
  %v1001 = vsub.s32 4, %v1000
  %v1002 = vrot.slane %v48, %v1001
  %v1003 = vmul.f32 %v998, %v1002
  %v1004 = vlaneseq
  %v1005 = vshrl.u32 %v1004, 7
  %v1006 = vsub.s32 5, %v1005
  %v1007 = vrot.slane %v48, %v1006
  %v1008 = vadd.f32 %v1003, %v1007
  %1010 = vrot.lane.b32.xlu0 %v800, 32
  %v1011 = vpop.permute.xlu0 %1010
  %v1013 = vsel %vm582, %v1008, %v1011
  %vm1014 = vcmask 459776
  %1015 = vst.msk [vmem:[%s3] sm:$0x3] %vm1014, %v1013
  // Predicated region
  $region14: #{attn2d_forward.1} parent=0 // pred_check
    _
  $region15: #{attn2d_forward.1} parent=0 // pred_check_branch
    %1017 = sbr.rel (0) target = $region17
  $region16: #{attn2d_forward.1} parent=0 // pred_region
    _
  $region17: #{attn2d_forward.1} parent=0 // pred_fallthru
    _
  // Predicated region
  $region18: #{attn2d_forward.1} parent=0 // pred_check
    _
  $region19: #{attn2d_forward.1} parent=0 // pred_check_branch
    %1019 = sbr.rel (0) target = $region21
  $region20: #{attn2d_forward.1} parent=0 // pred_region
    _
  $region21: #{attn2d_forward.1} parent=0 // pred_fallthru
    _

</llo_original>
